<compile_context>
chip_gen: v6e
topology: v6e:2x2x1
jax: 0.10.0
libtpu: 0.0.40
codegen_flags: <defaults>
</compile_context>

<pallas_src>
import functools

import jax
import jax.numpy as jnp
from jax.experimental import pallas as pl
from jax.experimental.pallas import tpu as pltpu

_MAX_LANE = 1024                      # widest lane-dense last dim we try
_PAD_LANE = 512                       # lane width for the rare padded fallback
_TARGET_TILE_ELEMS = 512 * 1024       # ~28 MiB double-buffered at 54 B/elem (f32)
_VMEM_LIMIT_BYTES = 40 * 1024 * 1024  # explicit scoped-VMEM limit (<= v7x 64 MiB phys)


def _elementwise_kernel(x_ref,
                        add_ref, sub_ref, mul_ref, div_ref, pow_ref,
                        gt_ref, lt_ref, eq_ref):
    x = x_ref[...]
    add_ref[...] = x + 2.0
    sub_ref[...] = x - 1.0
    mul_ref[...] = x * 3.0
    div_ref[...] = x * 0.5          # exact for IEEE floats: x / 2 == x * 0.5
    pow_ref[...] = x * x            # x ** 2
    gt_ref[...] = (x > 1.0).astype(gt_ref.dtype)
    lt_ref[...] = (x < 5.0).astype(lt_ref.dtype)
    eq_ref[...] = (x == 3.0).astype(eq_ref.dtype)


def _build_call(rows, tr, lane, float_dtype, mask_dtype, dim_sem):
    spec = pl.BlockSpec((tr, lane), lambda i: (i, 0))
    fshape = jax.ShapeDtypeStruct((rows, lane), float_dtype)
    mshape = jax.ShapeDtypeStruct((rows, lane), mask_dtype)
    n = rows * lane
    fbytes = jnp.dtype(float_dtype).itemsize
    mbytes = jnp.dtype(mask_dtype).itemsize
    return pl.pallas_call(
        _elementwise_kernel,
        out_shape=(fshape,) * 5 + (mshape,) * 3,
        grid=(pl.cdiv(rows, tr),),
        in_specs=[spec],
        out_specs=(spec,) * 8,
        compiler_params=pltpu.CompilerParams(
            dimension_semantics=dim_sem,
            vmem_limit_bytes=_VMEM_LIMIT_BYTES),
        cost_estimate=pl.CostEstimate(
            flops=8 * n,
            transcendentals=0,
            bytes_accessed=n * (6 * fbytes + 3 * mbytes)),
    )


@functools.lru_cache(maxsize=None)
def _probe_config():
    """Ahead-of-time (eager, cached) probe for (mask_dtype, dimension_semantics).

    Preference order: bool masks from the kernel (no wrapper cast passes) and
    CORE_PARALLEL (both TensorCores on v7x).  Each candidate is compiled, run
    on a tiny tile and checked against a JAX reference, so the selection is
    reliable even when pt_module_forward is later traced inside an outer jit.
    """
    rows, lane = 8, 128
    x = (jnp.arange(rows * lane, dtype=jnp.float32).reshape(rows, lane) * 0.01
         - 3.0)
    x = x.at[0, :4].set(3.0)   # exercise the == 3 branch exactly
    ref = (x + 2, x - 1, x * 3, x / 2, x * x, x > 1, x < 5, x == 3)

    sems = []
    core_par = getattr(pltpu, "CORE_PARALLEL", None)
    if core_par is not None:
        sems.append((core_par,))
    sems.append(("parallel",))

    for mask_dtype in (jnp.bool_, jnp.int8):
        for sem in sems:
            try:
                outs = jax.block_until_ready(
                    _build_call(rows, rows, lane, jnp.float32,
                                mask_dtype, sem)(x))
                ok = True
                for got, want in zip(outs, ref):
                    if want.dtype == jnp.bool_:
                        ok &= bool(jnp.array_equal(got.astype(jnp.bool_), want))
                    else:
                        ok &= bool(jnp.allclose(got, want,
                                                rtol=1e-6, atol=1e-6))
                if ok:
                    return (mask_dtype, sem)
            except Exception:
                continue
    # Last-resort configuration that always lowers.
    return (jnp.int8, ("arbitrary",))


def _pick_lane(n):
    """Largest multiple-of-128 divisor of n (<= _MAX_LANE); 0 if none exists."""
    for lane in range(_MAX_LANE, 127, -128):
        if n % lane == 0:
            return lane
    return 0


def pt_module_forward(x):
    """Reproduces PtModule.forward for a float NCHW tensor."""
    orig_shape = x.shape
    fdt = x.dtype
    n = x.size
    mask_dtype, dim_sem = _probe_config()

    lane = _pick_lane(n)
    padded = lane == 0
    if padded:
        # Rare fallback (no multiple-of-128 divisor): pad + slice costs extra
        # HBM traffic but keeps arbitrary sizes correct.
        lane = _PAD_LANE
        rows = pl.cdiv(n, lane)
        xf = jnp.pad(jnp.ravel(x), (0, rows * lane - n))
    else:
        rows = n // lane
        xf = jnp.ravel(x)          # metadata-only for contiguous input
    x2d = xf.reshape(rows, lane)

    # Rows per tile: full extent when small (always legal), otherwise a large
    # multiple-of-32 tile targeting ~28 MiB of double-buffered VMEM.
    tr = max(32, (_TARGET_TILE_ELEMS // lane) // 32 * 32)
    if tr >= rows:
        tr = rows

    outs = _build_call(rows, tr, lane, fdt, mask_dtype, dim_sem)(x2d)

    def _restore(a):
        if padded:
            a = a.reshape(-1)[:n]
        return a.reshape(orig_shape)

    add, sub, mul, div, powr, gt, lt, eq = map(_restore, outs)
    if gt.dtype != jnp.bool_:
        # Only reached when the AOT probe found bool outputs un-lowerable.
        gt, lt, eq = (m.astype(jnp.bool_) for m in (gt, lt, eq))
    return add, sub, mul, div, powr, gt, lt, eq


if __name__ == "__main__":
    key = jax.random.PRNGKey(0)
    # Small NCHW input consistent with the module's elementwise forward.
    x = jax.random.normal(key, (2, 4, 16, 16), dtype=jnp.float32) * 3.0
    # Force some exact equalities with 3.0 so the == branch is exercised.
    x = x.at[0, 0, 0, :4].set(3.0)

    outs = jax.block_until_ready(pt_module_forward(x))

    # Reference check against plain JAX (mirrors the PyTorch semantics).
    ref = (x + 2, x - 1, x * 3, x / 2, x ** 2, x > 1, x < 5, x == 3)
    for got, want in zip(outs, ref):
        assert got.shape == want.shape, (got.shape, want.shape)
        assert got.dtype == want.dtype, (got.dtype, want.dtype)
        if want.dtype == jnp.bool_:
            assert bool(jnp.array_equal(got, want))
        else:
            assert bool(jnp.allclose(got, want, rtol=1e-6, atol=1e-6))

    print("KERNEL_OK")
</pallas_src>

<mosaic_0001>
module attributes {stable_mosaic.version = 11 : i64} {
  func.func @_elementwise_kernel(%arg0: i32, %arg1: memref<8x128xf32, #tpu.memory_space<vmem>>, %arg2: memref<8x128xf32, #tpu.memory_space<vmem>>, %arg3: memref<8x128xf32, #tpu.memory_space<vmem>>, %arg4: memref<8x128xf32, #tpu.memory_space<vmem>>, %arg5: memref<8x128xf32, #tpu.memory_space<vmem>>, %arg6: memref<8x128xf32, #tpu.memory_space<vmem>>, %arg7: memref<8x128xi32, #tpu.memory_space<vmem>>, %arg8: memref<8x128xi32, #tpu.memory_space<vmem>>, %arg9: memref<8x128xi32, #tpu.memory_space<vmem>>) attributes {dimension_semantics = [#tpu.dimension_semantics<core_parallel>], iteration_bounds = array<i64: 1>, scalar_prefetch = 0 : i64, scratch_operands = 0 : i64, tpu.core_type = #tpu.core_type<tc>, window_params = [{transform_indices = @transform_0, window_bounds = array<i64: 8, 128>}, {transform_indices = @transform_1, window_bounds = array<i64: 8, 128>}, {transform_indices = @transform_2, window_bounds = array<i64: 8, 128>}, {transform_indices = @transform_3, window_bounds = array<i64: 8, 128>}, {transform_indices = @transform_4, window_bounds = array<i64: 8, 128>}, {transform_indices = @transform_5, window_bounds = array<i64: 8, 128>}, {transform_indices = @transform_6, window_bounds = array<i64: 8, 128>}, {transform_indices = @transform_7, window_bounds = array<i64: 8, 128>}, {transform_indices = @transform_8, window_bounds = array<i64: 8, 128>}]} {
    %c0 = arith.constant 0 : index
    %c0_0 = arith.constant 0 : index
    %0 = vector.load %arg1[%c0, %c0_0] : memref<8x128xf32, #tpu.memory_space<vmem>>, vector<8x128xf32>
    %cst = arith.constant 2.000000e+00 : f32
    %1 = vector.broadcast %cst : f32 to vector<8x128xf32>
    %2 = arith.addf %0, %1 : vector<8x128xf32>
    %c0_1 = arith.constant 0 : index
    %c0_2 = arith.constant 0 : index
    %3 = vector.load %arg2[%c0_1, %c0_2] : memref<8x128xf32, #tpu.memory_space<vmem>>, vector<8x128xf32>
    tpu.vector_store %arg2[%c0_1, %c0_2], %2 {strides = array<i32>} : memref<8x128xf32, #tpu.memory_space<vmem>>, vector<8x128xf32>,
    %cst_3 = arith.constant 1.000000e+00 : f32
    %4 = vector.broadcast %cst_3 : f32 to vector<8x128xf32>
    %5 = arith.subf %0, %4 : vector<8x128xf32>
    %c0_4 = arith.constant 0 : index
    %c0_5 = arith.constant 0 : index
    %6 = vector.load %arg3[%c0_4, %c0_5] : memref<8x128xf32, #tpu.memory_space<vmem>>, vector<8x128xf32>
    tpu.vector_store %arg3[%c0_4, %c0_5], %5 {strides = array<i32>} : memref<8x128xf32, #tpu.memory_space<vmem>>, vector<8x128xf32>,
    %cst_6 = arith.constant 3.000000e+00 : f32
    %7 = vector.broadcast %cst_6 : f32 to vector<8x128xf32>
    %8 = arith.mulf %0, %7 : vector<8x128xf32>
    %c0_7 = arith.constant 0 : index
    %c0_8 = arith.constant 0 : index
    %9 = vector.load %arg4[%c0_7, %c0_8] : memref<8x128xf32, #tpu.memory_space<vmem>>, vector<8x128xf32>
    tpu.vector_store %arg4[%c0_7, %c0_8], %8 {strides = array<i32>} : memref<8x128xf32, #tpu.memory_space<vmem>>, vector<8x128xf32>,
    %cst_9 = arith.constant 5.000000e-01 : f32
    %10 = vector.broadcast %cst_9 : f32 to vector<8x128xf32>
    %11 = arith.mulf %0, %10 : vector<8x128xf32>
    %c0_10 = arith.constant 0 : index
    %c0_11 = arith.constant 0 : index
    %12 = vector.load %arg5[%c0_10, %c0_11] : memref<8x128xf32, #tpu.memory_space<vmem>>, vector<8x128xf32>
    tpu.vector_store %arg5[%c0_10, %c0_11], %11 {strides = array<i32>} : memref<8x128xf32, #tpu.memory_space<vmem>>, vector<8x128xf32>,
    %13 = arith.mulf %0, %0 : vector<8x128xf32>
    %c0_12 = arith.constant 0 : index
    %c0_13 = arith.constant 0 : index
    %14 = vector.load %arg6[%c0_12, %c0_13] : memref<8x128xf32, #tpu.memory_space<vmem>>, vector<8x128xf32>
    tpu.vector_store %arg6[%c0_12, %c0_13], %13 {strides = array<i32>} : memref<8x128xf32, #tpu.memory_space<vmem>>, vector<8x128xf32>,
    %cst_14 = arith.constant 1.000000e+00 : f32
    %15 = vector.broadcast %cst_14 : f32 to vector<8x128xf32>
    %16 = arith.cmpf ogt, %0, %15 : vector<8x128xf32>
    %c0_15 = arith.constant 0 : index
    %c0_16 = arith.constant 0 : index
    %17 = vector.load %arg7[%c0_15, %c0_16] : memref<8x128xi32, #tpu.memory_space<vmem>>, vector<8x128xi32>
    %18 = arith.extui %16 : vector<8x128xi1> to vector<8x128xi32>
    %cst_17 = arith.constant dense<0> : vector<8x128xi32>
    %19 = arith.cmpi ne, %17, %cst_17 : vector<8x128xi32>
    tpu.vector_store %arg7[%c0_15, %c0_16], %18 {strides = array<i32>} : memref<8x128xi32, #tpu.memory_space<vmem>>, vector<8x128xi32>,
    %cst_18 = arith.constant 5.000000e+00 : f32
    %20 = vector.broadcast %cst_18 : f32 to vector<8x128xf32>
    %21 = arith.cmpf olt, %0, %20 : vector<8x128xf32>
    %c0_19 = arith.constant 0 : index
    %c0_20 = arith.constant 0 : index
    %22 = vector.load %arg8[%c0_19, %c0_20] : memref<8x128xi32, #tpu.memory_space<vmem>>, vector<8x128xi32>
    %23 = arith.extui %21 : vector<8x128xi1> to vector<8x128xi32>
    %cst_21 = arith.constant dense<0> : vector<8x128xi32>
    %24 = arith.cmpi ne, %22, %cst_21 : vector<8x128xi32>
    tpu.vector_store %arg8[%c0_19, %c0_20], %23 {strides = array<i32>} : memref<8x128xi32, #tpu.memory_space<vmem>>, vector<8x128xi32>,
    %cst_22 = arith.constant 3.000000e+00 : f32
    %25 = vector.broadcast %cst_22 : f32 to vector<8x128xf32>
    %26 = arith.cmpf oeq, %0, %25 : vector<8x128xf32>
    %c0_23 = arith.constant 0 : index
    %c0_24 = arith.constant 0 : index
    %27 = vector.load %arg9[%c0_23, %c0_24] : memref<8x128xi32, #tpu.memory_space<vmem>>, vector<8x128xi32>
    %28 = arith.extui %26 : vector<8x128xi1> to vector<8x128xi32>
    %cst_25 = arith.constant dense<0> : vector<8x128xi32>
    %29 = arith.cmpi ne, %27, %cst_25 : vector<8x128xi32>
    tpu.vector_store %arg9[%c0_23, %c0_24], %28 {strides = array<i32>} : memref<8x128xi32, #tpu.memory_space<vmem>>, vector<8x128xi32>,
    return
  }
  func.func @transform_0(%arg0: i32) -> (i32, i32) {
    %c0_i32 = arith.constant 0 : i32
    %c0_i32_0 = arith.constant 0 : i32
    return %arg0, %c0_i32 : i32, i32
  }
  func.func @transform_1(%arg0: i32) -> (i32, i32) {
    %c0_i32 = arith.constant 0 : i32
    %c0_i32_0 = arith.constant 0 : i32
    return %arg0, %c0_i32 : i32, i32
  }
  func.func @transform_2(%arg0: i32) -> (i32, i32) {
    %c0_i32 = arith.constant 0 : i32
    %c0_i32_0 = arith.constant 0 : i32
    return %arg0, %c0_i32 : i32, i32
  }
  func.func @transform_3(%arg0: i32) -> (i32, i32) {
    %c0_i32 = arith.constant 0 : i32
    %c0_i32_0 = arith.constant 0 : i32
    return %arg0, %c0_i32 : i32, i32
  }
  func.func @transform_4(%arg0: i32) -> (i32, i32) {
    %c0_i32 = arith.constant 0 : i32
    %c0_i32_0 = arith.constant 0 : i32
    return %arg0, %c0_i32 : i32, i32
  }
  func.func @transform_5(%arg0: i32) -> (i32, i32) {
    %c0_i32 = arith.constant 0 : i32
    %c0_i32_0 = arith.constant 0 : i32
    return %arg0, %c0_i32 : i32, i32
  }
  func.func @transform_6(%arg0: i32) -> (i32, i32) {
    %c0_i32 = arith.constant 0 : i32
    %c0_i32_0 = arith.constant 0 : i32
    return %arg0, %c0_i32 : i32, i32
  }
  func.func @transform_7(%arg0: i32) -> (i32, i32) {
    %c0_i32 = arith.constant 0 : i32
    %c0_i32_0 = arith.constant 0 : i32
    return %arg0, %c0_i32 : i32, i32
  }
  func.func @transform_8(%arg0: i32) -> (i32, i32) {
    %c0_i32 = arith.constant 0 : i32
    %c0_i32_0 = arith.constant 0 : i32
    return %arg0, %c0_i32 : i32, i32
  }
}

module attributes {stable_mosaic.version = 11 : i64} {
  func.func @_elementwise_kernel(%arg0: i32, %arg1: memref<8x128xf32, #tpu.memory_space<vmem>>, %arg2: memref<8x128xf32, #tpu.memory_space<vmem>>, %arg3: memref<8x128xf32, #tpu.memory_space<vmem>>, %arg4: memref<8x128xf32, #tpu.memory_space<vmem>>, %arg5: memref<8x128xf32, #tpu.memory_space<vmem>>, %arg6: memref<8x128xf32, #tpu.memory_space<vmem>>, %arg7: memref<8x128xi32, #tpu.memory_space<vmem>>, %arg8: memref<8x128xi32, #tpu.memory_space<vmem>>, %arg9: memref<8x128xi32, #tpu.memory_space<vmem>>) attributes {dimension_semantics = [#tpu.dimension_semantics<parallel>], iteration_bounds = array<i64: 1>, scalar_prefetch = 0 : i64, scratch_operands = 0 : i64, tpu.core_type = #tpu.core_type<tc>, window_params = [{transform_indices = @transform_0, window_bounds = array<i64: 8, 128>}, {transform_indices = @transform_1, window_bounds = array<i64: 8, 128>}, {transform_indices = @transform_2, window_bounds = array<i64: 8, 128>}, {transform_indices = @transform_3, window_bounds = array<i64: 8, 128>}, {transform_indices = @transform_4, window_bounds = array<i64: 8, 128>}, {transform_indices = @transform_5, window_bounds = array<i64: 8, 128>}, {transform_indices = @transform_6, window_bounds = array<i64: 8, 128>}, {transform_indices = @transform_7, window_bounds = array<i64: 8, 128>}, {transform_indices = @transform_8, window_bounds = array<i64: 8, 128>}]} {
    %c0 = arith.constant 0 : index
    %c0_0 = arith.constant 0 : index
    %0 = vector.load %arg1[%c0, %c0_0] : memref<8x128xf32, #tpu.memory_space<vmem>>, vector<8x128xf32>
    %cst = arith.constant 2.000000e+00 : f32
    %1 = vector.broadcast %cst : f32 to vector<8x128xf32>
    %2 = arith.addf %0, %1 : vector<8x128xf32>
    %c0_1 = arith.constant 0 : index
    %c0_2 = arith.constant 0 : index
    %3 = vector.load %arg2[%c0_1, %c0_2] : memref<8x128xf32, #tpu.memory_space<vmem>>, vector<8x128xf32>
    tpu.vector_store %arg2[%c0_1, %c0_2], %2 {strides = array<i32>} : memref<8x128xf32, #tpu.memory_space<vmem>>, vector<8x128xf32>,
    %cst_3 = arith.constant 1.000000e+00 : f32
    %4 = vector.broadcast %cst_3 : f32 to vector<8x128xf32>
    %5 = arith.subf %0, %4 : vector<8x128xf32>
    %c0_4 = arith.constant 0 : index
    %c0_5 = arith.constant 0 : index
    %6 = vector.load %arg3[%c0_4, %c0_5] : memref<8x128xf32, #tpu.memory_space<vmem>>, vector<8x128xf32>
    tpu.vector_store %arg3[%c0_4, %c0_5], %5 {strides = array<i32>} : memref<8x128xf32, #tpu.memory_space<vmem>>, vector<8x128xf32>,
    %cst_6 = arith.constant 3.000000e+00 : f32
    %7 = vector.broadcast %cst_6 : f32 to vector<8x128xf32>
    %8 = arith.mulf %0, %7 : vector<8x128xf32>
    %c0_7 = arith.constant 0 : index
    %c0_8 = arith.constant 0 : index
    %9 = vector.load %arg4[%c0_7, %c0_8] : memref<8x128xf32, #tpu.memory_space<vmem>>, vector<8x128xf32>
    tpu.vector_store %arg4[%c0_7, %c0_8], %8 {strides = array<i32>} : memref<8x128xf32, #tpu.memory_space<vmem>>, vector<8x128xf32>,
    %cst_9 = arith.constant 5.000000e-01 : f32
    %10 = vector.broadcast %cst_9 : f32 to vector<8x128xf32>
    %11 = arith.mulf %0, %10 : vector<8x128xf32>
    %c0_10 = arith.constant 0 : index
    %c0_11 = arith.constant 0 : index
    %12 = vector.load %arg5[%c0_10, %c0_11] : memref<8x128xf32, #tpu.memory_space<vmem>>, vector<8x128xf32>
    tpu.vector_store %arg5[%c0_10, %c0_11], %11 {strides = array<i32>} : memref<8x128xf32, #tpu.memory_space<vmem>>, vector<8x128xf32>,
    %13 = arith.mulf %0, %0 : vector<8x128xf32>
    %c0_12 = arith.constant 0 : index
    %c0_13 = arith.constant 0 : index
    %14 = vector.load %arg6[%c0_12, %c0_13] : memref<8x128xf32, #tpu.memory_space<vmem>>, vector<8x128xf32>
    tpu.vector_store %arg6[%c0_12, %c0_13], %13 {strides = array<i32>} : memref<8x128xf32, #tpu.memory_space<vmem>>, vector<8x128xf32>,
    %cst_14 = arith.constant 1.000000e+00 : f32
    %15 = vector.broadcast %cst_14 : f32 to vector<8x128xf32>
    %16 = arith.cmpf ogt, %0, %15 : vector<8x128xf32>
    %c0_15 = arith.constant 0 : index
    %c0_16 = arith.constant 0 : index
    %17 = vector.load %arg7[%c0_15, %c0_16] : memref<8x128xi32, #tpu.memory_space<vmem>>, vector<8x128xi32>
    %18 = arith.extui %16 : vector<8x128xi1> to vector<8x128xi32>
    %cst_17 = arith.constant dense<0> : vector<8x128xi32>
    %19 = arith.cmpi ne, %17, %cst_17 : vector<8x128xi32>
    tpu.vector_store %arg7[%c0_15, %c0_16], %18 {strides = array<i32>} : memref<8x128xi32, #tpu.memory_space<vmem>>, vector<8x128xi32>,
    %cst_18 = arith.constant 5.000000e+00 : f32
    %20 = vector.broadcast %cst_18 : f32 to vector<8x128xf32>
    %21 = arith.cmpf olt, %0, %20 : vector<8x128xf32>
    %c0_19 = arith.constant 0 : index
    %c0_20 = arith.constant 0 : index
    %22 = vector.load %arg8[%c0_19, %c0_20] : memref<8x128xi32, #tpu.memory_space<vmem>>, vector<8x128xi32>
    %23 = arith.extui %21 : vector<8x128xi1> to vector<8x128xi32>
    %cst_21 = arith.constant dense<0> : vector<8x128xi32>
    %24 = arith.cmpi ne, %22, %cst_21 : vector<8x128xi32>
    tpu.vector_store %arg8[%c0_19, %c0_20], %23 {strides = array<i32>} : memref<8x128xi32, #tpu.memory_space<vmem>>, vector<8x128xi32>,
    %cst_22 = arith.constant 3.000000e+00 : f32
    %25 = vector.broadcast %cst_22 : f32 to vector<8x128xf32>
    %26 = arith.cmpf oeq, %0, %25 : vector<8x128xf32>
    %c0_23 = arith.constant 0 : index
    %c0_24 = arith.constant 0 : index
    %27 = vector.load %arg9[%c0_23, %c0_24] : memref<8x128xi32, #tpu.memory_space<vmem>>, vector<8x128xi32>
    %28 = arith.extui %26 : vector<8x128xi1> to vector<8x128xi32>
    %cst_25 = arith.constant dense<0> : vector<8x128xi32>
    %29 = arith.cmpi ne, %27, %cst_25 : vector<8x128xi32>
    tpu.vector_store %arg9[%c0_23, %c0_24], %28 {strides = array<i32>} : memref<8x128xi32, #tpu.memory_space<vmem>>, vector<8x128xi32>,
    return
  }
  func.func @transform_0(%arg0: i32) -> (i32, i32) {
    %c0_i32 = arith.constant 0 : i32
    %c0_i32_0 = arith.constant 0 : i32
    return %arg0, %c0_i32 : i32, i32
  }
  func.func @transform_1(%arg0: i32) -> (i32, i32) {
    %c0_i32 = arith.constant 0 : i32
    %c0_i32_0 = arith.constant 0 : i32
    return %arg0, %c0_i32 : i32, i32
  }
  func.func @transform_2(%arg0: i32) -> (i32, i32) {
    %c0_i32 = arith.constant 0 : i32
    %c0_i32_0 = arith.constant 0 : i32
    return %arg0, %c0_i32 : i32, i32
  }
  func.func @transform_3(%arg0: i32) -> (i32, i32) {
    %c0_i32 = arith.constant 0 : i32
    %c0_i32_0 = arith.constant 0 : i32
    return %arg0, %c0_i32 : i32, i32
  }
  func.func @transform_4(%arg0: i32) -> (i32, i32) {
    %c0_i32 = arith.constant 0 : i32
    %c0_i32_0 = arith.constant 0 : i32
    return %arg0, %c0_i32 : i32, i32
  }
  func.func @transform_5(%arg0: i32) -> (i32, i32) {
    %c0_i32 = arith.constant 0 : i32
    %c0_i32_0 = arith.constant 0 : i32
    return %arg0, %c0_i32 : i32, i32
  }
  func.func @transform_6(%arg0: i32) -> (i32, i32) {
    %c0_i32 = arith.constant 0 : i32
    %c0_i32_0 = arith.constant 0 : i32
    return %arg0, %c0_i32 : i32, i32
  }
  func.func @transform_7(%arg0: i32) -> (i32, i32) {
    %c0_i32 = arith.constant 0 : i32
    %c0_i32_0 = arith.constant 0 : i32
    return %arg0, %c0_i32 : i32, i32
  }
  func.func @transform_8(%arg0: i32) -> (i32, i32) {
    %c0_i32 = arith.constant 0 : i32
    %c0_i32_0 = arith.constant 0 : i32
    return %arg0, %c0_i32 : i32, i32
  }
}

module attributes {stable_mosaic.version = 11 : i64} {
  func.func @_elementwise_kernel(%arg0: i32, %arg1: memref<8x128xf32, #tpu.memory_space<vmem>>, %arg2: memref<8x128xf32, #tpu.memory_space<vmem>>, %arg3: memref<8x128xf32, #tpu.memory_space<vmem>>, %arg4: memref<8x128xf32, #tpu.memory_space<vmem>>, %arg5: memref<8x128xf32, #tpu.memory_space<vmem>>, %arg6: memref<8x128xf32, #tpu.memory_space<vmem>>, %arg7: memref<8x128xi8, #tpu.memory_space<vmem>>, %arg8: memref<8x128xi8, #tpu.memory_space<vmem>>, %arg9: memref<8x128xi8, #tpu.memory_space<vmem>>) attributes {dimension_semantics = [#tpu.dimension_semantics<core_parallel>], iteration_bounds = array<i64: 1>, scalar_prefetch = 0 : i64, scratch_operands = 0 : i64, tpu.core_type = #tpu.core_type<tc>, window_params = [{transform_indices = @transform_0, window_bounds = array<i64: 8, 128>}, {transform_indices = @transform_1, window_bounds = array<i64: 8, 128>}, {transform_indices = @transform_2, window_bounds = array<i64: 8, 128>}, {transform_indices = @transform_3, window_bounds = array<i64: 8, 128>}, {transform_indices = @transform_4, window_bounds = array<i64: 8, 128>}, {transform_indices = @transform_5, window_bounds = array<i64: 8, 128>}, {transform_indices = @transform_6, window_bounds = array<i64: 8, 128>}, {transform_indices = @transform_7, window_bounds = array<i64: 8, 128>}, {transform_indices = @transform_8, window_bounds = array<i64: 8, 128>}]} {
    %c0 = arith.constant 0 : index
    %c0_0 = arith.constant 0 : index
    %0 = vector.load %arg1[%c0, %c0_0] : memref<8x128xf32, #tpu.memory_space<vmem>>, vector<8x128xf32>
    %cst = arith.constant 2.000000e+00 : f32
    %1 = vector.broadcast %cst : f32 to vector<8x128xf32>
    %2 = arith.addf %0, %1 : vector<8x128xf32>
    %c0_1 = arith.constant 0 : index
    %c0_2 = arith.constant 0 : index
    %3 = vector.load %arg2[%c0_1, %c0_2] : memref<8x128xf32, #tpu.memory_space<vmem>>, vector<8x128xf32>
    tpu.vector_store %arg2[%c0_1, %c0_2], %2 {strides = array<i32>} : memref<8x128xf32, #tpu.memory_space<vmem>>, vector<8x128xf32>,
    %cst_3 = arith.constant 1.000000e+00 : f32
    %4 = vector.broadcast %cst_3 : f32 to vector<8x128xf32>
    %5 = arith.subf %0, %4 : vector<8x128xf32>
    %c0_4 = arith.constant 0 : index
    %c0_5 = arith.constant 0 : index
    %6 = vector.load %arg3[%c0_4, %c0_5] : memref<8x128xf32, #tpu.memory_space<vmem>>, vector<8x128xf32>
    tpu.vector_store %arg3[%c0_4, %c0_5], %5 {strides = array<i32>} : memref<8x128xf32, #tpu.memory_space<vmem>>, vector<8x128xf32>,
    %cst_6 = arith.constant 3.000000e+00 : f32
    %7 = vector.broadcast %cst_6 : f32 to vector<8x128xf32>
    %8 = arith.mulf %0, %7 : vector<8x128xf32>
    %c0_7 = arith.constant 0 : index
    %c0_8 = arith.constant 0 : index
    %9 = vector.load %arg4[%c0_7, %c0_8] : memref<8x128xf32, #tpu.memory_space<vmem>>, vector<8x128xf32>
    tpu.vector_store %arg4[%c0_7, %c0_8], %8 {strides = array<i32>} : memref<8x128xf32, #tpu.memory_space<vmem>>, vector<8x128xf32>,
    %cst_9 = arith.constant 5.000000e-01 : f32
    %10 = vector.broadcast %cst_9 : f32 to vector<8x128xf32>
    %11 = arith.mulf %0, %10 : vector<8x128xf32>
    %c0_10 = arith.constant 0 : index
    %c0_11 = arith.constant 0 : index
    %12 = vector.load %arg5[%c0_10, %c0_11] : memref<8x128xf32, #tpu.memory_space<vmem>>, vector<8x128xf32>
    tpu.vector_store %arg5[%c0_10, %c0_11], %11 {strides = array<i32>} : memref<8x128xf32, #tpu.memory_space<vmem>>, vector<8x128xf32>,
    %13 = arith.mulf %0, %0 : vector<8x128xf32>
    %c0_12 = arith.constant 0 : index
    %c0_13 = arith.constant 0 : index
    %14 = vector.load %arg6[%c0_12, %c0_13] : memref<8x128xf32, #tpu.memory_space<vmem>>, vector<8x128xf32>
    tpu.vector_store %arg6[%c0_12, %c0_13], %13 {strides = array<i32>} : memref<8x128xf32, #tpu.memory_space<vmem>>, vector<8x128xf32>,
    %cst_14 = arith.constant 1.000000e+00 : f32
    %15 = vector.broadcast %cst_14 : f32 to vector<8x128xf32>
    %16 = arith.cmpf ogt, %0, %15 : vector<8x128xf32>
    %17 = arith.extui %16 : vector<8x128xi1> to vector<8x128xi8>
    %c0_15 = arith.constant 0 : index
    %c0_16 = arith.constant 0 : index
    %18 = vector.load %arg7[%c0_15, %c0_16] : memref<8x128xi8, #tpu.memory_space<vmem>>, vector<8x128xi8>
    tpu.vector_store %arg7[%c0_15, %c0_16], %17 {strides = array<i32>} : memref<8x128xi8, #tpu.memory_space<vmem>>, vector<8x128xi8>,
    %cst_17 = arith.constant 5.000000e+00 : f32
    %19 = vector.broadcast %cst_17 : f32 to vector<8x128xf32>
    %20 = arith.cmpf olt, %0, %19 : vector<8x128xf32>
    %21 = arith.extui %20 : vector<8x128xi1> to vector<8x128xi8>
    %c0_18 = arith.constant 0 : index
    %c0_19 = arith.constant 0 : index
    %22 = vector.load %arg8[%c0_18, %c0_19] : memref<8x128xi8, #tpu.memory_space<vmem>>, vector<8x128xi8>
    tpu.vector_store %arg8[%c0_18, %c0_19], %21 {strides = array<i32>} : memref<8x128xi8, #tpu.memory_space<vmem>>, vector<8x128xi8>,
    %cst_20 = arith.constant 3.000000e+00 : f32
    %23 = vector.broadcast %cst_20 : f32 to vector<8x128xf32>
    %24 = arith.cmpf oeq, %0, %23 : vector<8x128xf32>
    %25 = arith.extui %24 : vector<8x128xi1> to vector<8x128xi8>
    %c0_21 = arith.constant 0 : index
    %c0_22 = arith.constant 0 : index
    %26 = vector.load %arg9[%c0_21, %c0_22] : memref<8x128xi8, #tpu.memory_space<vmem>>, vector<8x128xi8>
    tpu.vector_store %arg9[%c0_21, %c0_22], %25 {strides = array<i32>} : memref<8x128xi8, #tpu.memory_space<vmem>>, vector<8x128xi8>,
    return
  }
  func.func @transform_0(%arg0: i32) -> (i32, i32) {
    %c0_i32 = arith.constant 0 : i32
    %c0_i32_0 = arith.constant 0 : i32
    return %arg0, %c0_i32 : i32, i32
  }
  func.func @transform_1(%arg0: i32) -> (i32, i32) {
    %c0_i32 = arith.constant 0 : i32
    %c0_i32_0 = arith.constant 0 : i32
    return %arg0, %c0_i32 : i32, i32
  }
  func.func @transform_2(%arg0: i32) -> (i32, i32) {
    %c0_i32 = arith.constant 0 : i32
    %c0_i32_0 = arith.constant 0 : i32
    return %arg0, %c0_i32 : i32, i32
  }
  func.func @transform_3(%arg0: i32) -> (i32, i32) {
    %c0_i32 = arith.constant 0 : i32
    %c0_i32_0 = arith.constant 0 : i32
    return %arg0, %c0_i32 : i32, i32
  }
  func.func @transform_4(%arg0: i32) -> (i32, i32) {
    %c0_i32 = arith.constant 0 : i32
    %c0_i32_0 = arith.constant 0 : i32
    return %arg0, %c0_i32 : i32, i32
  }
  func.func @transform_5(%arg0: i32) -> (i32, i32) {
    %c0_i32 = arith.constant 0 : i32
    %c0_i32_0 = arith.constant 0 : i32
    return %arg0, %c0_i32 : i32, i32
  }
  func.func @transform_6(%arg0: i32) -> (i32, i32) {
    %c0_i32 = arith.constant 0 : i32
    %c0_i32_0 = arith.constant 0 : i32
    return %arg0, %c0_i32 : i32, i32
  }
  func.func @transform_7(%arg0: i32) -> (i32, i32) {
    %c0_i32 = arith.constant 0 : i32
    %c0_i32_0 = arith.constant 0 : i32
    return %arg0, %c0_i32 : i32, i32
  }
  func.func @transform_8(%arg0: i32) -> (i32, i32) {
    %c0_i32 = arith.constant 0 : i32
    %c0_i32_0 = arith.constant 0 : i32
    return %arg0, %c0_i32 : i32, i32
  }
}

module attributes {stable_mosaic.version = 11 : i64} {
  func.func @_elementwise_kernel(%arg0: i32, %arg1: memref<8x128xf32, #tpu.memory_space<vmem>>, %arg2: memref<8x128xf32, #tpu.memory_space<vmem>>, %arg3: memref<8x128xf32, #tpu.memory_space<vmem>>, %arg4: memref<8x128xf32, #tpu.memory_space<vmem>>, %arg5: memref<8x128xf32, #tpu.memory_space<vmem>>, %arg6: memref<8x128xf32, #tpu.memory_space<vmem>>, %arg7: memref<8x128xi8, #tpu.memory_space<vmem>>, %arg8: memref<8x128xi8, #tpu.memory_space<vmem>>, %arg9: memref<8x128xi8, #tpu.memory_space<vmem>>) attributes {dimension_semantics = [#tpu.dimension_semantics<parallel>], iteration_bounds = array<i64: 1>, scalar_prefetch = 0 : i64, scratch_operands = 0 : i64, tpu.core_type = #tpu.core_type<tc>, window_params = [{transform_indices = @transform_0, window_bounds = array<i64: 8, 128>}, {transform_indices = @transform_1, window_bounds = array<i64: 8, 128>}, {transform_indices = @transform_2, window_bounds = array<i64: 8, 128>}, {transform_indices = @transform_3, window_bounds = array<i64: 8, 128>}, {transform_indices = @transform_4, window_bounds = array<i64: 8, 128>}, {transform_indices = @transform_5, window_bounds = array<i64: 8, 128>}, {transform_indices = @transform_6, window_bounds = array<i64: 8, 128>}, {transform_indices = @transform_7, window_bounds = array<i64: 8, 128>}, {transform_indices = @transform_8, window_bounds = array<i64: 8, 128>}]} {
    %c0 = arith.constant 0 : index
    %c0_0 = arith.constant 0 : index
    %0 = vector.load %arg1[%c0, %c0_0] : memref<8x128xf32, #tpu.memory_space<vmem>>, vector<8x128xf32>
    %cst = arith.constant 2.000000e+00 : f32
    %1 = vector.broadcast %cst : f32 to vector<8x128xf32>
    %2 = arith.addf %0, %1 : vector<8x128xf32>
    %c0_1 = arith.constant 0 : index
    %c0_2 = arith.constant 0 : index
    %3 = vector.load %arg2[%c0_1, %c0_2] : memref<8x128xf32, #tpu.memory_space<vmem>>, vector<8x128xf32>
    tpu.vector_store %arg2[%c0_1, %c0_2], %2 {strides = array<i32>} : memref<8x128xf32, #tpu.memory_space<vmem>>, vector<8x128xf32>,
    %cst_3 = arith.constant 1.000000e+00 : f32
    %4 = vector.broadcast %cst_3 : f32 to vector<8x128xf32>
    %5 = arith.subf %0, %4 : vector<8x128xf32>
    %c0_4 = arith.constant 0 : index
    %c0_5 = arith.constant 0 : index
    %6 = vector.load %arg3[%c0_4, %c0_5] : memref<8x128xf32, #tpu.memory_space<vmem>>, vector<8x128xf32>
    tpu.vector_store %arg3[%c0_4, %c0_5], %5 {strides = array<i32>} : memref<8x128xf32, #tpu.memory_space<vmem>>, vector<8x128xf32>,
    %cst_6 = arith.constant 3.000000e+00 : f32
    %7 = vector.broadcast %cst_6 : f32 to vector<8x128xf32>
    %8 = arith.mulf %0, %7 : vector<8x128xf32>
    %c0_7 = arith.constant 0 : index
    %c0_8 = arith.constant 0 : index
    %9 = vector.load %arg4[%c0_7, %c0_8] : memref<8x128xf32, #tpu.memory_space<vmem>>, vector<8x128xf32>
    tpu.vector_store %arg4[%c0_7, %c0_8], %8 {strides = array<i32>} : memref<8x128xf32, #tpu.memory_space<vmem>>, vector<8x128xf32>,
    %cst_9 = arith.constant 5.000000e-01 : f32
    %10 = vector.broadcast %cst_9 : f32 to vector<8x128xf32>
    %11 = arith.mulf %0, %10 : vector<8x128xf32>
    %c0_10 = arith.constant 0 : index
    %c0_11 = arith.constant 0 : index
    %12 = vector.load %arg5[%c0_10, %c0_11] : memref<8x128xf32, #tpu.memory_space<vmem>>, vector<8x128xf32>
    tpu.vector_store %arg5[%c0_10, %c0_11], %11 {strides = array<i32>} : memref<8x128xf32, #tpu.memory_space<vmem>>, vector<8x128xf32>,
    %13 = arith.mulf %0, %0 : vector<8x128xf32>
    %c0_12 = arith.constant 0 : index
    %c0_13 = arith.constant 0 : index
    %14 = vector.load %arg6[%c0_12, %c0_13] : memref<8x128xf32, #tpu.memory_space<vmem>>, vector<8x128xf32>
    tpu.vector_store %arg6[%c0_12, %c0_13], %13 {strides = array<i32>} : memref<8x128xf32, #tpu.memory_space<vmem>>, vector<8x128xf32>,
    %cst_14 = arith.constant 1.000000e+00 : f32
    %15 = vector.broadcast %cst_14 : f32 to vector<8x128xf32>
    %16 = arith.cmpf ogt, %0, %15 : vector<8x128xf32>
    %17 = arith.extui %16 : vector<8x128xi1> to vector<8x128xi8>
    %c0_15 = arith.constant 0 : index
    %c0_16 = arith.constant 0 : index
    %18 = vector.load %arg7[%c0_15, %c0_16] : memref<8x128xi8, #tpu.memory_space<vmem>>, vector<8x128xi8>
    tpu.vector_store %arg7[%c0_15, %c0_16], %17 {strides = array<i32>} : memref<8x128xi8, #tpu.memory_space<vmem>>, vector<8x128xi8>,
    %cst_17 = arith.constant 5.000000e+00 : f32
    %19 = vector.broadcast %cst_17 : f32 to vector<8x128xf32>
    %20 = arith.cmpf olt, %0, %19 : vector<8x128xf32>
    %21 = arith.extui %20 : vector<8x128xi1> to vector<8x128xi8>
    %c0_18 = arith.constant 0 : index
    %c0_19 = arith.constant 0 : index
    %22 = vector.load %arg8[%c0_18, %c0_19] : memref<8x128xi8, #tpu.memory_space<vmem>>, vector<8x128xi8>
    tpu.vector_store %arg8[%c0_18, %c0_19], %21 {strides = array<i32>} : memref<8x128xi8, #tpu.memory_space<vmem>>, vector<8x128xi8>,
    %cst_20 = arith.constant 3.000000e+00 : f32
    %23 = vector.broadcast %cst_20 : f32 to vector<8x128xf32>
    %24 = arith.cmpf oeq, %0, %23 : vector<8x128xf32>
    %25 = arith.extui %24 : vector<8x128xi1> to vector<8x128xi8>
    %c0_21 = arith.constant 0 : index
    %c0_22 = arith.constant 0 : index
    %26 = vector.load %arg9[%c0_21, %c0_22] : memref<8x128xi8, #tpu.memory_space<vmem>>, vector<8x128xi8>
    tpu.vector_store %arg9[%c0_21, %c0_22], %25 {strides = array<i32>} : memref<8x128xi8, #tpu.memory_space<vmem>>, vector<8x128xi8>,
    return
  }
  func.func @transform_0(%arg0: i32) -> (i32, i32) {
    %c0_i32 = arith.constant 0 : i32
    %c0_i32_0 = arith.constant 0 : i32
    return %arg0, %c0_i32 : i32, i32
  }
  func.func @transform_1(%arg0: i32) -> (i32, i32) {
    %c0_i32 = arith.constant 0 : i32
    %c0_i32_0 = arith.constant 0 : i32
    return %arg0, %c0_i32 : i32, i32
  }
  func.func @transform_2(%arg0: i32) -> (i32, i32) {
    %c0_i32 = arith.constant 0 : i32
    %c0_i32_0 = arith.constant 0 : i32
    return %arg0, %c0_i32 : i32, i32
  }
  func.func @transform_3(%arg0: i32) -> (i32, i32) {
    %c0_i32 = arith.constant 0 : i32
    %c0_i32_0 = arith.constant 0 : i32
    return %arg0, %c0_i32 : i32, i32
  }
  func.func @transform_4(%arg0: i32) -> (i32, i32) {
    %c0_i32 = arith.constant 0 : i32
    %c0_i32_0 = arith.constant 0 : i32
    return %arg0, %c0_i32 : i32, i32
  }
  func.func @transform_5(%arg0: i32) -> (i32, i32) {
    %c0_i32 = arith.constant 0 : i32
    %c0_i32_0 = arith.constant 0 : i32
    return %arg0, %c0_i32 : i32, i32
  }
  func.func @transform_6(%arg0: i32) -> (i32, i32) {
    %c0_i32 = arith.constant 0 : i32
    %c0_i32_0 = arith.constant 0 : i32
    return %arg0, %c0_i32 : i32, i32
  }
  func.func @transform_7(%arg0: i32) -> (i32, i32) {
    %c0_i32 = arith.constant 0 : i32
    %c0_i32_0 = arith.constant 0 : i32
    return %arg0, %c0_i32 : i32, i32
  }
  func.func @transform_8(%arg0: i32) -> (i32, i32) {
    %c0_i32 = arith.constant 0 : i32
    %c0_i32_0 = arith.constant 0 : i32
    return %arg0, %c0_i32 : i32, i32
  }
}

module attributes {stable_mosaic.version = 11 : i64} {
  func.func @_elementwise_kernel(%arg0: i32, %arg1: memref<2x1024xf32, #tpu.memory_space<vmem>>, %arg2: memref<2x1024xf32, #tpu.memory_space<vmem>>, %arg3: memref<2x1024xf32, #tpu.memory_space<vmem>>, %arg4: memref<2x1024xf32, #tpu.memory_space<vmem>>, %arg5: memref<2x1024xf32, #tpu.memory_space<vmem>>, %arg6: memref<2x1024xf32, #tpu.memory_space<vmem>>, %arg7: memref<2x1024xi8, #tpu.memory_space<vmem>>, %arg8: memref<2x1024xi8, #tpu.memory_space<vmem>>, %arg9: memref<2x1024xi8, #tpu.memory_space<vmem>>) attributes {dimension_semantics = [#tpu.dimension_semantics<arbitrary>], iteration_bounds = array<i64: 1>, scalar_prefetch = 0 : i64, scratch_operands = 0 : i64, tpu.core_type = #tpu.core_type<tc>, window_params = [{transform_indices = @transform_0, window_bounds = array<i64: 2, 1024>}, {transform_indices = @transform_1, window_bounds = array<i64: 2, 1024>}, {transform_indices = @transform_2, window_bounds = array<i64: 2, 1024>}, {transform_indices = @transform_3, window_bounds = array<i64: 2, 1024>}, {transform_indices = @transform_4, window_bounds = array<i64: 2, 1024>}, {transform_indices = @transform_5, window_bounds = array<i64: 2, 1024>}, {transform_indices = @transform_6, window_bounds = array<i64: 2, 1024>}, {transform_indices = @transform_7, window_bounds = array<i64: 2, 1024>}, {transform_indices = @transform_8, window_bounds = array<i64: 2, 1024>}]} {
    %c0 = arith.constant 0 : index
    %c0_0 = arith.constant 0 : index
    %0 = vector.load %arg1[%c0, %c0_0] : memref<2x1024xf32, #tpu.memory_space<vmem>>, vector<2x1024xf32>
    %cst = arith.constant 2.000000e+00 : f32
    %1 = vector.broadcast %cst : f32 to vector<2x1024xf32>
    %2 = arith.addf %0, %1 : vector<2x1024xf32>
    %c0_1 = arith.constant 0 : index
    %c0_2 = arith.constant 0 : index
    %3 = vector.load %arg2[%c0_1, %c0_2] : memref<2x1024xf32, #tpu.memory_space<vmem>>, vector<2x1024xf32>
    tpu.vector_store %arg2[%c0_1, %c0_2], %2 {strides = array<i32>} : memref<2x1024xf32, #tpu.memory_space<vmem>>, vector<2x1024xf32>,
    %cst_3 = arith.constant 1.000000e+00 : f32
    %4 = vector.broadcast %cst_3 : f32 to vector<2x1024xf32>
    %5 = arith.subf %0, %4 : vector<2x1024xf32>
    %c0_4 = arith.constant 0 : index
    %c0_5 = arith.constant 0 : index
    %6 = vector.load %arg3[%c0_4, %c0_5] : memref<2x1024xf32, #tpu.memory_space<vmem>>, vector<2x1024xf32>
    tpu.vector_store %arg3[%c0_4, %c0_5], %5 {strides = array<i32>} : memref<2x1024xf32, #tpu.memory_space<vmem>>, vector<2x1024xf32>,
    %cst_6 = arith.constant 3.000000e+00 : f32
    %7 = vector.broadcast %cst_6 : f32 to vector<2x1024xf32>
    %8 = arith.mulf %0, %7 : vector<2x1024xf32>
    %c0_7 = arith.constant 0 : index
    %c0_8 = arith.constant 0 : index
    %9 = vector.load %arg4[%c0_7, %c0_8] : memref<2x1024xf32, #tpu.memory_space<vmem>>, vector<2x1024xf32>
    tpu.vector_store %arg4[%c0_7, %c0_8], %8 {strides = array<i32>} : memref<2x1024xf32, #tpu.memory_space<vmem>>, vector<2x1024xf32>,
    %cst_9 = arith.constant 5.000000e-01 : f32
    %10 = vector.broadcast %cst_9 : f32 to vector<2x1024xf32>
    %11 = arith.mulf %0, %10 : vector<2x1024xf32>
    %c0_10 = arith.constant 0 : index
    %c0_11 = arith.constant 0 : index
    %12 = vector.load %arg5[%c0_10, %c0_11] : memref<2x1024xf32, #tpu.memory_space<vmem>>, vector<2x1024xf32>
    tpu.vector_store %arg5[%c0_10, %c0_11], %11 {strides = array<i32>} : memref<2x1024xf32, #tpu.memory_space<vmem>>, vector<2x1024xf32>,
    %13 = arith.mulf %0, %0 : vector<2x1024xf32>
    %c0_12 = arith.constant 0 : index
    %c0_13 = arith.constant 0 : index
    %14 = vector.load %arg6[%c0_12, %c0_13] : memref<2x1024xf32, #tpu.memory_space<vmem>>, vector<2x1024xf32>
    tpu.vector_store %arg6[%c0_12, %c0_13], %13 {strides = array<i32>} : memref<2x1024xf32, #tpu.memory_space<vmem>>, vector<2x1024xf32>,
    %cst_14 = arith.constant 1.000000e+00 : f32
    %15 = vector.broadcast %cst_14 : f32 to vector<2x1024xf32>
    %16 = arith.cmpf ogt, %0, %15 : vector<2x1024xf32>
    %17 = arith.extui %16 : vector<2x1024xi1> to vector<2x1024xi8>
    %c0_15 = arith.constant 0 : index
    %c0_16 = arith.constant 0 : index
    %18 = vector.load %arg7[%c0_15, %c0_16] : memref<2x1024xi8, #tpu.memory_space<vmem>>, vector<2x1024xi8>
    tpu.vector_store %arg7[%c0_15, %c0_16], %17 {strides = array<i32>} : memref<2x1024xi8, #tpu.memory_space<vmem>>, vector<2x1024xi8>,
    %cst_17 = arith.constant 5.000000e+00 : f32
    %19 = vector.broadcast %cst_17 : f32 to vector<2x1024xf32>
    %20 = arith.cmpf olt, %0, %19 : vector<2x1024xf32>
    %21 = arith.extui %20 : vector<2x1024xi1> to vector<2x1024xi8>
    %c0_18 = arith.constant 0 : index
    %c0_19 = arith.constant 0 : index
    %22 = vector.load %arg8[%c0_18, %c0_19] : memref<2x1024xi8, #tpu.memory_space<vmem>>, vector<2x1024xi8>
    tpu.vector_store %arg8[%c0_18, %c0_19], %21 {strides = array<i32>} : memref<2x1024xi8, #tpu.memory_space<vmem>>, vector<2x1024xi8>,
    %cst_20 = arith.constant 3.000000e+00 : f32
    %23 = vector.broadcast %cst_20 : f32 to vector<2x1024xf32>
    %24 = arith.cmpf oeq, %0, %23 : vector<2x1024xf32>
    %25 = arith.extui %24 : vector<2x1024xi1> to vector<2x1024xi8>
    %c0_21 = arith.constant 0 : index
    %c0_22 = arith.constant 0 : index
    %26 = vector.load %arg9[%c0_21, %c0_22] : memref<2x1024xi8, #tpu.memory_space<vmem>>, vector<2x1024xi8>
    tpu.vector_store %arg9[%c0_21, %c0_22], %25 {strides = array<i32>} : memref<2x1024xi8, #tpu.memory_space<vmem>>, vector<2x1024xi8>,
    return
  }
  func.func @transform_0(%arg0: i32) -> (i32, i32) {
    %c0_i32 = arith.constant 0 : i32
    %c0_i32_0 = arith.constant 0 : i32
    return %arg0, %c0_i32 : i32, i32
  }
  func.func @transform_1(%arg0: i32) -> (i32, i32) {
    %c0_i32 = arith.constant 0 : i32
    %c0_i32_0 = arith.constant 0 : i32
    return %arg0, %c0_i32 : i32, i32
  }
  func.func @transform_2(%arg0: i32) -> (i32, i32) {
    %c0_i32 = arith.constant 0 : i32
    %c0_i32_0 = arith.constant 0 : i32
    return %arg0, %c0_i32 : i32, i32
  }
  func.func @transform_3(%arg0: i32) -> (i32, i32) {
    %c0_i32 = arith.constant 0 : i32
    %c0_i32_0 = arith.constant 0 : i32
    return %arg0, %c0_i32 : i32, i32
  }
  func.func @transform_4(%arg0: i32) -> (i32, i32) {
    %c0_i32 = arith.constant 0 : i32
    %c0_i32_0 = arith.constant 0 : i32
    return %arg0, %c0_i32 : i32, i32
  }
  func.func @transform_5(%arg0: i32) -> (i32, i32) {
    %c0_i32 = arith.constant 0 : i32
    %c0_i32_0 = arith.constant 0 : i32
    return %arg0, %c0_i32 : i32, i32
  }
  func.func @transform_6(%arg0: i32) -> (i32, i32) {
    %c0_i32 = arith.constant 0 : i32
    %c0_i32_0 = arith.constant 0 : i32
    return %arg0, %c0_i32 : i32, i32
  }
  func.func @transform_7(%arg0: i32) -> (i32, i32) {
    %c0_i32 = arith.constant 0 : i32
    %c0_i32_0 = arith.constant 0 : i32
    return %arg0, %c0_i32 : i32, i32
  }
  func.func @transform_8(%arg0: i32) -> (i32, i32) {
    %c0_i32 = arith.constant 0 : i32
    %c0_i32_0 = arith.constant 0 : i32
    return %arg0, %c0_i32 : i32, i32
  }
}

</mosaic_0001>

<llo_original>
// kernel: tpu_custom_call.1
$region0: #{tpu_custom_call.1}
  #allocation0 [shape = 'u32[]', space=smem, size = 0x4, offset = 0x4, fixed_abs, tag = 'smem constant byte address 0x4 - core index']
  #allocation1 [shape = 'u32[144,128]{1,0:T(1,128)}', space=vmem, size = 0x12000, scoped, tag = 'internal scratch']
  %s0 = inlined_call_operand.hbm [shape: f32[8,128], index: 0, kind: input, shape index: {}]
  %s1 = inlined_call_operand.hbm [shape: f32[8,128], index: 1, kind: output, shape index: {0}]
  %s2 = inlined_call_operand.hbm [shape: f32[8,128], index: 2, kind: output, shape index: {1}]
  %s3 = inlined_call_operand.hbm [shape: f32[8,128], index: 3, kind: output, shape index: {2}]
  %s4 = inlined_call_operand.hbm [shape: f32[8,128], index: 4, kind: output, shape index: {3}]
  %s5 = inlined_call_operand.hbm [shape: f32[8,128], index: 5, kind: output, shape index: {4}]
  %s6 = inlined_call_operand.vmem [shape: s32[8,128], index: 6, kind: output, shape index: {5}]
  %s7 = inlined_call_operand.vmem [shape: s32[8,128], index: 7, kind: output, shape index: {6}]
  %s8 = inlined_call_operand.vmem [shape: s32[8,128], index: 8, kind: output, shape index: {7}]
  %9 = xla_tuple %s1, %s2, %s3, %s4, %s5, %s6, %s7, %s8
  %s10 = sld [smem:[#allocation0]]
  $region74: #{tpu_custom_call.1} parent=0
    _
  %s12 = ssub.s32 1, %s10
  %s13 = scalar_select 0, %s12, %s10
  $region1: #{tpu_custom_call.1} parent=0
    #allocation2 [shape = 'u8[4096]{0}', space=vmem, size = 0x1000, scoped, tag = 'input window, operand 0, single buffered']
    #allocation3 [shape = 's32[1]{0}', space=sflag, size = 0x4, scoped, tag = 'scoped memory for tpu_custom_call.1']
    #allocation4 [shape = 's32[1]{0}', space=sflag, size = 0x4, scoped, tag = 'scoped memory for tpu_custom_call.1']
    #allocation5 [shape = 'u8[4096]{0}', space=vmem, size = 0x1000, scoped, tag = 'output window, operand 0, single buffered']
    #allocation6 [shape = 'u8[4096]{0}', space=vmem, size = 0x1000, scoped, tag = 'output window, operand 1, single buffered']
    #allocation7 [shape = 's32[1]{0}', space=sflag, size = 0x4, scoped, tag = 'scoped memory for tpu_custom_call.1']
    #allocation8 [shape = 'u8[4096]{0}', space=vmem, size = 0x1000, scoped, tag = 'output window, operand 2, single buffered']
    #allocation9 [shape = 'u8[4096]{0}', space=vmem, size = 0x1000, scoped, tag = 'output window, operand 3, single buffered']
    #allocation10 [shape = 's32[1]{0}', space=sflag, size = 0x4, scoped, tag = 'scoped memory for tpu_custom_call.1']
    #allocation11 [shape = 'u8[4096]{0}', space=vmem, size = 0x1000, scoped, tag = 'output window, operand 4, single buffered']
    %14 = vsyncpa [#allocation3], 0
    %15 = vsyncpa [#allocation4], 0
    %16 = vsyncpa [#allocation7], 0
    %17 = vsyncpa [#allocation10], 0
    // Predicated region
    $region2: #{tpu_custom_call.1} parent=1 // pred_check
      _
    $region3: #{tpu_custom_call.1} parent=1 // pred_check_branch
      %19 = sbr.rel (0) target = $region5
    $region4: #{tpu_custom_call.1} parent=1 // pred_region
      %s21 = ssub.s32 128, 128
      %22 = vsyncadd [#allocation3], %s21
      %s23 = smul.addr %s13, 128
      %s24 = scalar_lea.hbm %s0, %s23
      %s26 = sshll.u32 [#allocation2], 4
      %s27 = int_to_ptr.vmem [resolvable:$true] %s26
      %29 = dma.hbm_to_vmem [thread:$0]  %s24, 128, %s27, [#allocation3]
    $region5: #{tpu_custom_call.1} parent=1 // pred_fallthru
      _
    // Predicated region
    $region6: #{tpu_custom_call.1} parent=1 // pred_check
      _
    $region7: #{tpu_custom_call.1} parent=1 // pred_check_branch
      %31 = sbr.rel (0) target = $region9
    $region8: #{tpu_custom_call.1} parent=1 // pred_region
      %32 = dma.done [#allocation3], 128
    $region9: #{tpu_custom_call.1} parent=1 // pred_fallthru
      _
    %p33 = scmp.lt.s32.totalorder %s13, 0
    %s34 = scalar_select %p33, %s13, 0
    %s35 = smul.addr %s34, 8
    %s36 = scalar_lea.vmem %s6, %s35
    %p37 = scmp.lt.s32.totalorder %s13, 0
    %s38 = scalar_select %p37, %s13, 0
    %s39 = smul.addr %s38, 8
    %s40 = scalar_lea.vmem %s7, %s39
    %p41 = scmp.lt.s32.totalorder %s13, 0
    %s42 = scalar_select %p41, %s13, 0
    %s43 = smul.addr %s42, 8
    %s44 = scalar_lea.vmem %s8, %s43
    %p45 = scmp.lt.s32.totalorder %s13, 0
    %s46 = scalar_select %p45, %s13, 0
    %s47 = smul.addr %s46, 8
    %s48 = scalar_lea.vmem %s6, %s47
    %p49 = scmp.lt.s32.totalorder %s13, 0
    %s50 = scalar_select %p49, %s13, 0
    %s51 = smul.addr %s50, 8
    %s52 = scalar_lea.vmem %s7, %s51
    %p53 = scmp.lt.s32.totalorder %s13, 0
    %s54 = scalar_select %p53, %s13, 0
    %s55 = smul.addr %s54, 8
    %s56 = scalar_lea.vmem %s8, %s55
    %v57 = vld [vmem:[#allocation2] sm:$0xff]
    %v58 = vadd.f32 %v57, 2.0
    %59 = vst [vmem:[#allocation5] sm:$0xff] %v58
    %v60 = vsub.f32 %v57, 1.0
    %61 = vst [vmem:[#allocation6] sm:$0xff] %v60
    %v62 = vmul.f32 %v57, 3.0
    %63 = vst [vmem:[#allocation8] sm:$0xff] %v62
    %v64 = vmul.f32 %v57, 0.5
    %65 = vst [vmem:[#allocation9] sm:$0xff] %v64
    %v66 = vmul.f32 %v57, %v57
    %67 = vst [vmem:[#allocation11] sm:$0xff] %v66
    %vm68 = vcmp.gt.f32.partialorder %v57, 1.0
    %v69 = vsel %vm68, 1, 0
    %70 = vst [vmem:[%s48] sm:$0xff] %v69
    %vm71 = vcmp.lt.f32.partialorder %v57, 5.0
    %v72 = vsel %vm71, 1, 0
    %73 = vst [vmem:[%s52] sm:$0xff] %v72
    %vm74 = vcmp.eq.f32.partialorder %v57, 3.0
    %v75 = vsel %vm74, 1, 0
    %76 = vst [vmem:[%s56] sm:$0xff] %v75
    %p77 = scmp.lt.s32.totalorder %s13, 0
    %s78 = scalar_select %p77, %s13, 0
    %s79 = smul.addr %s78, 8
    %s80 = scalar_lea.vmem %s6, %s79
    %p81 = scmp.lt.s32.totalorder %s13, 0
    %s82 = scalar_select %p81, %s13, 0
    %s83 = smul.addr %s82, 8
    %s84 = scalar_lea.vmem %s7, %s83
    %p85 = scmp.lt.s32.totalorder %s13, 0
    %s86 = scalar_select %p85, %s13, 0
    %s87 = smul.addr %s86, 8
    %s88 = scalar_lea.vmem %s8, %s87
    // Predicated region
    $region10: #{tpu_custom_call.1} parent=1 // pred_check
      _
    $region11: #{tpu_custom_call.1} parent=1 // pred_check_branch
      %90 = sbr.rel (0) target = $region13
    $region12: #{tpu_custom_call.1} parent=1 // pred_region
      %s92 = ssub.s32 128, 128
      %93 = vsyncadd [#allocation4], %s92
      %s94 = smul.addr %s13, 128
      %s95 = scalar_lea.hbm %s1, %s94
      %s97 = sshll.u32 [#allocation5], 4
      %s98 = int_to_ptr.vmem [resolvable:$true] %s97
      %100 = dma.vmem_to_hbm [thread:$0]  %s98, 128, %s95, [#allocation4]
    $region13: #{tpu_custom_call.1} parent=1 // pred_fallthru
      _
    // Predicated region
    $region14: #{tpu_custom_call.1} parent=1 // pred_check
      _
    $region15: #{tpu_custom_call.1} parent=1 // pred_check_branch
      %102 = sbr.rel (0) target = $region17
    $region16: #{tpu_custom_call.1} parent=1 // pred_region
      %s104 = ssub.s32 128, 128
      %105 = vsyncadd [#allocation7], %s104
      %s106 = smul.addr %s13, 128
      %s107 = scalar_lea.hbm %s2, %s106
      %s109 = sshll.u32 [#allocation6], 4
      %s110 = int_to_ptr.vmem [resolvable:$true] %s109
      %112 = dma.vmem_to_hbm [thread:$0]  %s110, 128, %s107, [#allocation7]
    $region17: #{tpu_custom_call.1} parent=1 // pred_fallthru
      _
    // Predicated region
    $region18: #{tpu_custom_call.1} parent=1 // pred_check
      _
    $region19: #{tpu_custom_call.1} parent=1 // pred_check_branch
      %114 = sbr.rel (0) target = $region21
    $region20: #{tpu_custom_call.1} parent=1 // pred_region
      %s116 = ssub.s32 128, 128
      %117 = vsyncadd [#allocation7], %s116
      %s118 = smul.addr %s13, 128
      %s119 = scalar_lea.hbm %s3, %s118
      %s121 = sshll.u32 [#allocation8], 4
      %s122 = int_to_ptr.vmem [resolvable:$true] %s121
      %124 = dma.vmem_to_hbm [thread:$0]  %s122, 128, %s119, [#allocation7]
    $region21: #{tpu_custom_call.1} parent=1 // pred_fallthru
      _
    // Predicated region
    $region22: #{tpu_custom_call.1} parent=1 // pred_check
      _
    $region23: #{tpu_custom_call.1} parent=1 // pred_check_branch
      %126 = sbr.rel (0) target = $region25
    $region24: #{tpu_custom_call.1} parent=1 // pred_region
      %s128 = ssub.s32 128, 128
      %129 = vsyncadd [#allocation10], %s128
      %s130 = smul.addr %s13, 128
      %s131 = scalar_lea.hbm %s4, %s130
      %s133 = sshll.u32 [#allocation9], 4
      %s134 = int_to_ptr.vmem [resolvable:$true] %s133
      %136 = dma.vmem_to_hbm [thread:$0]  %s134, 128, %s131, [#allocation10]
    $region25: #{tpu_custom_call.1} parent=1 // pred_fallthru
      _
    // Predicated region
    $region26: #{tpu_custom_call.1} parent=1 // pred_check
      _
    $region27: #{tpu_custom_call.1} parent=1 // pred_check_branch
      %138 = sbr.rel (0) target = $region29
    $region28: #{tpu_custom_call.1} parent=1 // pred_region
      %s140 = ssub.s32 128, 128
      %141 = vsyncadd [#allocation10], %s140
      %s142 = smul.addr %s13, 128
      %s143 = scalar_lea.hbm %s5, %s142
      %s145 = sshll.u32 [#allocation11], 4
      %s146 = int_to_ptr.vmem [resolvable:$true] %s145
      %148 = dma.vmem_to_hbm [thread:$0]  %s146, 128, %s143, [#allocation10]
    $region29: #{tpu_custom_call.1} parent=1 // pred_fallthru
      _
    // Predicated region
    $region30: #{tpu_custom_call.1} parent=1 // pred_check
      _
    $region31: #{tpu_custom_call.1} parent=1 // pred_check_branch
      %150 = sbr.rel (0) target = $region33
    $region32: #{tpu_custom_call.1} parent=1 // pred_region
      _
    $region33: #{tpu_custom_call.1} parent=1 // pred_fallthru
      _
    // Predicated region
    $region34: #{tpu_custom_call.1} parent=1 // pred_check
      _
    $region35: #{tpu_custom_call.1} parent=1 // pred_check_branch
      %152 = sbr.rel (0) target = $region37
    $region36: #{tpu_custom_call.1} parent=1 // pred_region
      _
    $region37: #{tpu_custom_call.1} parent=1 // pred_fallthru
      _
    // Predicated region
    $region38: #{tpu_custom_call.1} parent=1 // pred_check
      _
    $region39: #{tpu_custom_call.1} parent=1 // pred_check_branch
      %154 = sbr.rel (0) target = $region41
    $region40: #{tpu_custom_call.1} parent=1 // pred_region
      _
    $region41: #{tpu_custom_call.1} parent=1 // pred_fallthru
      _
    // Predicated region
    $region42: #{tpu_custom_call.1} parent=1 // pred_check
      _
    $region43: #{tpu_custom_call.1} parent=1 // pred_check_branch
      %156 = sbr.rel (0) target = $region45
    $region44: #{tpu_custom_call.1} parent=1 // pred_region
      %157 = dma.done [#allocation4], 128
    $region45: #{tpu_custom_call.1} parent=1 // pred_fallthru
      _
    // Predicated region
    $region46: #{tpu_custom_call.1} parent=1 // pred_check
      _
    $region47: #{tpu_custom_call.1} parent=1 // pred_check_branch
      %159 = sbr.rel (0) target = $region49
    $region48: #{tpu_custom_call.1} parent=1 // pred_region
      %160 = dma.done [#allocation7], 128
    $region49: #{tpu_custom_call.1} parent=1 // pred_fallthru
      _
    // Predicated region
    $region50: #{tpu_custom_call.1} parent=1 // pred_check
      _
    $region51: #{tpu_custom_call.1} parent=1 // pred_check_branch
      %162 = sbr.rel (0) target = $region53
    $region52: #{tpu_custom_call.1} parent=1 // pred_region
      %163 = dma.done [#allocation7], 128
    $region53: #{tpu_custom_call.1} parent=1 // pred_fallthru
      _
    // Predicated region
    $region54: #{tpu_custom_call.1} parent=1 // pred_check
      _
    $region55: #{tpu_custom_call.1} parent=1 // pred_check_branch
      %165 = sbr.rel (0) target = $region57
    $region56: #{tpu_custom_call.1} parent=1 // pred_region
      %166 = dma.done [#allocation10], 128
    $region57: #{tpu_custom_call.1} parent=1 // pred_fallthru
      _
    // Predicated region
    $region58: #{tpu_custom_call.1} parent=1 // pred_check
      _
    $region59: #{tpu_custom_call.1} parent=1 // pred_check_branch
      %168 = sbr.rel (0) target = $region61
    $region60: #{tpu_custom_call.1} parent=1 // pred_region
      %169 = dma.done [#allocation10], 128
    $region61: #{tpu_custom_call.1} parent=1 // pred_fallthru
      _
    // Predicated region
    $region62: #{tpu_custom_call.1} parent=1 // pred_check
      _
    $region63: #{tpu_custom_call.1} parent=1 // pred_check_branch
      %171 = sbr.rel (0) target = $region65
    $region64: #{tpu_custom_call.1} parent=1 // pred_region
      %p172 = scmp.lt.s32.totalorder %s13, 0
      %s173 = scalar_select %p172, %s13, 0
      %s174 = smul.addr %s173, 8
      %s175 = scalar_lea.vmem %s6, %s174
    $region65: #{tpu_custom_call.1} parent=1 // pred_fallthru
      _
    // Predicated region
    $region66: #{tpu_custom_call.1} parent=1 // pred_check
      _
    $region67: #{tpu_custom_call.1} parent=1 // pred_check_branch
      %177 = sbr.rel (0) target = $region69
    $region68: #{tpu_custom_call.1} parent=1 // pred_region
      %p178 = scmp.lt.s32.totalorder %s13, 0
      %s179 = scalar_select %p178, %s13, 0
      %s180 = smul.addr %s179, 8
      %s181 = scalar_lea.vmem %s7, %s180
    $region69: #{tpu_custom_call.1} parent=1 // pred_fallthru
      _
    // Predicated region
    $region70: #{tpu_custom_call.1} parent=1 // pred_check
      _
    $region71: #{tpu_custom_call.1} parent=1 // pred_check_branch
      %183 = sbr.rel (0) target = $region73
    $region72: #{tpu_custom_call.1} parent=1 // pred_region
      %p184 = scmp.lt.s32.totalorder %s13, 0
      %s185 = scalar_select %p184, %s13, 0
      %s186 = smul.addr %s185, 8
      %s187 = scalar_lea.vmem %s8, %s186
    $region73: #{tpu_custom_call.1} parent=1 // pred_fallthru
      _
    %188 = vsyncpa [#allocation3], 1
    %189 = vsyncpa [#allocation4], 1
    %190 = vsyncpa [#allocation7], 1
    %191 = vsyncpa [#allocation10], 1

// kernel: tpu_custom_call.1
$region0: #{tpu_custom_call.1}
  #allocation0 [shape = 'u32[]', space=smem, size = 0x4, offset = 0x4, fixed_abs, tag = 'smem constant byte address 0x4 - core index']
  #allocation1 [shape = 'u32[144,128]{1,0:T(1,128)}', space=vmem, size = 0x12000, scoped, tag = 'internal scratch']
  %s0 = inlined_call_operand.hbm [shape: f32[8,128], index: 0, kind: input, shape index: {}]
  %s1 = inlined_call_operand.hbm [shape: f32[8,128], index: 1, kind: output, shape index: {0}]
  %s2 = inlined_call_operand.hbm [shape: f32[8,128], index: 2, kind: output, shape index: {1}]
  %s3 = inlined_call_operand.hbm [shape: f32[8,128], index: 3, kind: output, shape index: {2}]
  %s4 = inlined_call_operand.hbm [shape: f32[8,128], index: 4, kind: output, shape index: {3}]
  %s5 = inlined_call_operand.hbm [shape: f32[8,128], index: 5, kind: output, shape index: {4}]
  %s6 = inlined_call_operand.vmem [shape: s32[8,128], index: 6, kind: output, shape index: {5}]
  %s7 = inlined_call_operand.vmem [shape: s32[8,128], index: 7, kind: output, shape index: {6}]
  %s8 = inlined_call_operand.vmem [shape: s32[8,128], index: 8, kind: output, shape index: {7}]
  %9 = xla_tuple %s1, %s2, %s3, %s4, %s5, %s6, %s7, %s8
  %s10 = sld [smem:[#allocation0]]
  $region74: #{tpu_custom_call.1} parent=0
    _
  %s12 = ssub.s32 1, %s10
  %s13 = scalar_select 0, %s12, %s10
  $region1: #{tpu_custom_call.1} parent=0
    #allocation2 [shape = 'u8[4096]{0}', space=vmem, size = 0x1000, scoped, tag = 'input window, operand 0, single buffered']
    #allocation3 [shape = 's32[1]{0}', space=sflag, size = 0x4, scoped, tag = 'scoped memory for tpu_custom_call.1']
    #allocation4 [shape = 's32[1]{0}', space=sflag, size = 0x4, scoped, tag = 'scoped memory for tpu_custom_call.1']
    #allocation5 [shape = 'u8[4096]{0}', space=vmem, size = 0x1000, scoped, tag = 'output window, operand 0, single buffered']
    #allocation6 [shape = 'u8[4096]{0}', space=vmem, size = 0x1000, scoped, tag = 'output window, operand 1, single buffered']
    #allocation7 [shape = 's32[1]{0}', space=sflag, size = 0x4, scoped, tag = 'scoped memory for tpu_custom_call.1']
    #allocation8 [shape = 'u8[4096]{0}', space=vmem, size = 0x1000, scoped, tag = 'output window, operand 2, single buffered']
    #allocation9 [shape = 'u8[4096]{0}', space=vmem, size = 0x1000, scoped, tag = 'output window, operand 3, single buffered']
    #allocation10 [shape = 's32[1]{0}', space=sflag, size = 0x4, scoped, tag = 'scoped memory for tpu_custom_call.1']
    #allocation11 [shape = 'u8[4096]{0}', space=vmem, size = 0x1000, scoped, tag = 'output window, operand 4, single buffered']
    %14 = vsyncpa [#allocation3], 0
    %15 = vsyncpa [#allocation4], 0
    %16 = vsyncpa [#allocation7], 0
    %17 = vsyncpa [#allocation10], 0
    // Predicated region
    $region2: #{tpu_custom_call.1} parent=1 // pred_check
      _
    $region3: #{tpu_custom_call.1} parent=1 // pred_check_branch
      %19 = sbr.rel (0) target = $region5
    $region4: #{tpu_custom_call.1} parent=1 // pred_region
      %s21 = ssub.s32 128, 128
      %22 = vsyncadd [#allocation3], %s21
      %s24 = sshll.u32 [#allocation2], 4
      %s25 = int_to_ptr.vmem [resolvable:$true] %s24
      %27 = dma.hbm_to_vmem [thread:$0]  %s0, 128, %s25, [#allocation3]
    $region5: #{tpu_custom_call.1} parent=1 // pred_fallthru
      _
    // Predicated region
    $region6: #{tpu_custom_call.1} parent=1 // pred_check
      _
    $region7: #{tpu_custom_call.1} parent=1 // pred_check_branch
      %29 = sbr.rel (0) target = $region9
    $region8: #{tpu_custom_call.1} parent=1 // pred_region
      %30 = dma.done [#allocation3], 128
    $region9: #{tpu_custom_call.1} parent=1 // pred_fallthru
      _
    %v31 = vld [vmem:[#allocation2] sm:$0xff]
    %v32 = vadd.f32 %v31, 2.0
    %33 = vst [vmem:[#allocation5] sm:$0xff] %v32
    %v34 = vsub.f32 %v31, 1.0
    %35 = vst [vmem:[#allocation6] sm:$0xff] %v34
    %v36 = vmul.f32 %v31, 3.0
    %37 = vst [vmem:[#allocation8] sm:$0xff] %v36
    %v38 = vmul.f32 %v31, 0.5
    %39 = vst [vmem:[#allocation9] sm:$0xff] %v38
    %v40 = vmul.f32 %v31, %v31
    %41 = vst [vmem:[#allocation11] sm:$0xff] %v40
    %vm42 = vcmp.gt.f32.partialorder %v31, 1.0
    %v43 = vsel %vm42, 1, 0
    %44 = vst [vmem:[%s6] sm:$0xff] %v43
    %vm45 = vcmp.lt.f32.partialorder %v31, 5.0
    %v46 = vsel %vm45, 1, 0
    %47 = vst [vmem:[%s7] sm:$0xff] %v46
    %vm48 = vcmp.eq.f32.partialorder %v31, 3.0
    %v49 = vsel %vm48, 1, 0
    %50 = vst [vmem:[%s8] sm:$0xff] %v49
    // Predicated region
    $region10: #{tpu_custom_call.1} parent=1 // pred_check
      _
    $region11: #{tpu_custom_call.1} parent=1 // pred_check_branch
      %52 = sbr.rel (0) target = $region13
    $region12: #{tpu_custom_call.1} parent=1 // pred_region
      %s54 = ssub.s32 128, 128
      %55 = vsyncadd [#allocation4], %s54
      %s57 = sshll.u32 [#allocation5], 4
      %s58 = int_to_ptr.vmem [resolvable:$true] %s57
      %60 = dma.vmem_to_hbm [thread:$0]  %s58, 128, %s1, [#allocation4]
    $region13: #{tpu_custom_call.1} parent=1 // pred_fallthru
      _
    // Predicated region
    $region14: #{tpu_custom_call.1} parent=1 // pred_check
      _
    $region15: #{tpu_custom_call.1} parent=1 // pred_check_branch
      %62 = sbr.rel (0) target = $region17
    $region16: #{tpu_custom_call.1} parent=1 // pred_region
      %s64 = ssub.s32 128, 128
      %65 = vsyncadd [#allocation7], %s64
      %s67 = sshll.u32 [#allocation6], 4
      %s68 = int_to_ptr.vmem [resolvable:$true] %s67
      %70 = dma.vmem_to_hbm [thread:$0]  %s68, 128, %s2, [#allocation7]
    $region17: #{tpu_custom_call.1} parent=1 // pred_fallthru
      _
    // Predicated region
    $region18: #{tpu_custom_call.1} parent=1 // pred_check
      _
    $region19: #{tpu_custom_call.1} parent=1 // pred_check_branch
      %72 = sbr.rel (0) target = $region21
    $region20: #{tpu_custom_call.1} parent=1 // pred_region
      %s74 = ssub.s32 128, 128
      %75 = vsyncadd [#allocation7], %s74
      %s77 = sshll.u32 [#allocation8], 4
      %s78 = int_to_ptr.vmem [resolvable:$true] %s77
      %80 = dma.vmem_to_hbm [thread:$0]  %s78, 128, %s3, [#allocation7]
    $region21: #{tpu_custom_call.1} parent=1 // pred_fallthru
      _
    // Predicated region
    $region22: #{tpu_custom_call.1} parent=1 // pred_check
      _
    $region23: #{tpu_custom_call.1} parent=1 // pred_check_branch
      %82 = sbr.rel (0) target = $region25
    $region24: #{tpu_custom_call.1} parent=1 // pred_region
      %s84 = ssub.s32 128, 128
      %85 = vsyncadd [#allocation10], %s84
      %s87 = sshll.u32 [#allocation9], 4
      %s88 = int_to_ptr.vmem [resolvable:$true] %s87
      %90 = dma.vmem_to_hbm [thread:$0]  %s88, 128, %s4, [#allocation10]
    $region25: #{tpu_custom_call.1} parent=1 // pred_fallthru
      _
    // Predicated region
    $region26: #{tpu_custom_call.1} parent=1 // pred_check
      _
    $region27: #{tpu_custom_call.1} parent=1 // pred_check_branch
      %92 = sbr.rel (0) target = $region29
    $region28: #{tpu_custom_call.1} parent=1 // pred_region
      %s94 = ssub.s32 128, 128
      %95 = vsyncadd [#allocation10], %s94
      %s97 = sshll.u32 [#allocation11], 4
      %s98 = int_to_ptr.vmem [resolvable:$true] %s97
      %100 = dma.vmem_to_hbm [thread:$0]  %s98, 128, %s5, [#allocation10]
    $region29: #{tpu_custom_call.1} parent=1 // pred_fallthru
      _
    // Predicated region
    $region30: #{tpu_custom_call.1} parent=1 // pred_check
      _
    $region31: #{tpu_custom_call.1} parent=1 // pred_check_branch
      %102 = sbr.rel (0) target = $region33
    $region32: #{tpu_custom_call.1} parent=1 // pred_region
      _
    $region33: #{tpu_custom_call.1} parent=1 // pred_fallthru
      _
    // Predicated region
    $region34: #{tpu_custom_call.1} parent=1 // pred_check
      _
    $region35: #{tpu_custom_call.1} parent=1 // pred_check_branch
      %104 = sbr.rel (0) target = $region37
    $region36: #{tpu_custom_call.1} parent=1 // pred_region
      _
    $region37: #{tpu_custom_call.1} parent=1 // pred_fallthru
      _
    // Predicated region
    $region38: #{tpu_custom_call.1} parent=1 // pred_check
      _
    $region39: #{tpu_custom_call.1} parent=1 // pred_check_branch
      %106 = sbr.rel (0) target = $region41
    $region40: #{tpu_custom_call.1} parent=1 // pred_region
      _
    $region41: #{tpu_custom_call.1} parent=1 // pred_fallthru
      _
    // Predicated region
    $region42: #{tpu_custom_call.1} parent=1 // pred_check
      _
    $region43: #{tpu_custom_call.1} parent=1 // pred_check_branch
      %108 = sbr.rel (0) target = $region45
    $region44: #{tpu_custom_call.1} parent=1 // pred_region
      %109 = dma.done [#allocation4], 128
    $region45: #{tpu_custom_call.1} parent=1 // pred_fallthru
      _
    // Predicated region
    $region46: #{tpu_custom_call.1} parent=1 // pred_check
      _
    $region47: #{tpu_custom_call.1} parent=1 // pred_check_branch
      %111 = sbr.rel (0) target = $region49
    $region48: #{tpu_custom_call.1} parent=1 // pred_region
      %112 = dma.done [#allocation7], 128
    $region49: #{tpu_custom_call.1} parent=1 // pred_fallthru
      _
    // Predicated region
    $region50: #{tpu_custom_call.1} parent=1 // pred_check
      _
    $region51: #{tpu_custom_call.1} parent=1 // pred_check_branch
      %114 = sbr.rel (0) target = $region53
    $region52: #{tpu_custom_call.1} parent=1 // pred_region
      %115 = dma.done [#allocation7], 128
    $region53: #{tpu_custom_call.1} parent=1 // pred_fallthru
      _
    // Predicated region
    $region54: #{tpu_custom_call.1} parent=1 // pred_check
      _
    $region55: #{tpu_custom_call.1} parent=1 // pred_check_branch
      %117 = sbr.rel (0) target = $region57
    $region56: #{tpu_custom_call.1} parent=1 // pred_region
      %118 = dma.done [#allocation10], 128
    $region57: #{tpu_custom_call.1} parent=1 // pred_fallthru
      _
    // Predicated region
    $region58: #{tpu_custom_call.1} parent=1 // pred_check
      _
    $region59: #{tpu_custom_call.1} parent=1 // pred_check_branch
      %120 = sbr.rel (0) target = $region61
    $region60: #{tpu_custom_call.1} parent=1 // pred_region
      %121 = dma.done [#allocation10], 128
    $region61: #{tpu_custom_call.1} parent=1 // pred_fallthru
      _
    // Predicated region
    $region62: #{tpu_custom_call.1} parent=1 // pred_check
      _
    $region63: #{tpu_custom_call.1} parent=1 // pred_check_branch
      %123 = sbr.rel (0) target = $region65
    $region64: #{tpu_custom_call.1} parent=1 // pred_region
      _
    $region65: #{tpu_custom_call.1} parent=1 // pred_fallthru
      _
    // Predicated region
    $region66: #{tpu_custom_call.1} parent=1 // pred_check
      _
    $region67: #{tpu_custom_call.1} parent=1 // pred_check_branch
      %125 = sbr.rel (0) target = $region69
    $region68: #{tpu_custom_call.1} parent=1 // pred_region
      _
    $region69: #{tpu_custom_call.1} parent=1 // pred_fallthru
      _
    // Predicated region
    $region70: #{tpu_custom_call.1} parent=1 // pred_check
      _
    $region71: #{tpu_custom_call.1} parent=1 // pred_check_branch
      %127 = sbr.rel (0) target = $region73
    $region72: #{tpu_custom_call.1} parent=1 // pred_region
      _
    $region73: #{tpu_custom_call.1} parent=1 // pred_fallthru
      _
    %128 = vsyncpa [#allocation3], 1
    %129 = vsyncpa [#allocation4], 1
    %130 = vsyncpa [#allocation7], 1
    %131 = vsyncpa [#allocation10], 1

// kernel: tpu_custom_call.1
$region0: #{tpu_custom_call.1}
  #allocation0 [shape = 'u32[]', space=smem, size = 0x4, offset = 0x4, fixed_abs, tag = 'smem constant byte address 0x4 - core index']
  #allocation1 [shape = 'u32[144,128]{1,0:T(1,128)}', space=vmem, size = 0x12000, scoped, tag = 'internal scratch']
  %s0 = inlined_call_operand.hbm [shape: f32[8,128], index: 0, kind: input, shape index: {}]
  %s1 = inlined_call_operand.hbm [shape: f32[8,128], index: 1, kind: output, shape index: {0}]
  %s2 = inlined_call_operand.hbm [shape: f32[8,128], index: 2, kind: output, shape index: {1}]
  %s3 = inlined_call_operand.hbm [shape: f32[8,128], index: 3, kind: output, shape index: {2}]
  %s4 = inlined_call_operand.hbm [shape: f32[8,128], index: 4, kind: output, shape index: {3}]
  %s5 = inlined_call_operand.hbm [shape: f32[8,128], index: 5, kind: output, shape index: {4}]
  %s6 = inlined_call_operand.hbm [shape: s8[8,128], index: 6, kind: output, shape index: {5}]
  %s7 = inlined_call_operand.hbm [shape: s8[8,128], index: 7, kind: output, shape index: {6}]
  %s8 = inlined_call_operand.hbm [shape: s8[8,128], index: 8, kind: output, shape index: {7}]
  %9 = xla_tuple %s1, %s2, %s3, %s4, %s5, %s6, %s7, %s8
  %s10 = sld [smem:[#allocation0]]
  $region74: #{tpu_custom_call.1} parent=0
    _
  %s12 = ssub.s32 1, %s10
  %s13 = scalar_select 0, %s12, %s10
  $region1: #{tpu_custom_call.1} parent=0
    #allocation2 [shape = 'u8[4096]{0}', space=vmem, size = 0x1000, scoped, tag = 'input window, operand 0, single buffered']
    #allocation3 [shape = 's32[1]{0}', space=sflag, size = 0x4, scoped, tag = 'scoped memory for tpu_custom_call.1']
    #allocation4 [shape = 's32[1]{0}', space=sflag, size = 0x4, scoped, tag = 'scoped memory for tpu_custom_call.1']
    #allocation5 [shape = 'u8[4096]{0}', space=vmem, size = 0x1000, scoped, tag = 'output window, operand 0, single buffered']
    #allocation6 [shape = 'u8[4096]{0}', space=vmem, size = 0x1000, scoped, tag = 'output window, operand 1, single buffered']
    #allocation7 [shape = 's32[1]{0}', space=sflag, size = 0x4, scoped, tag = 'scoped memory for tpu_custom_call.1']
    #allocation8 [shape = 'u8[4096]{0}', space=vmem, size = 0x1000, scoped, tag = 'output window, operand 2, single buffered']
    #allocation9 [shape = 'u8[4096]{0}', space=vmem, size = 0x1000, scoped, tag = 'output window, operand 3, single buffered']
    #allocation10 [shape = 's32[1]{0}', space=sflag, size = 0x4, scoped, tag = 'scoped memory for tpu_custom_call.1']
    #allocation11 [shape = 'u8[4096]{0}', space=vmem, size = 0x1000, scoped, tag = 'output window, operand 4, single buffered']
    #allocation12 [shape = 'u8[1024]{0}', space=vmem, size = 0x400, scoped, tag = 'output window, operand 5, single buffered']
    #allocation13 [shape = 's32[1]{0}', space=sflag, size = 0x4, scoped, tag = 'scoped memory for tpu_custom_call.1']
    #allocation14 [shape = 'u8[1024]{0}', space=vmem, size = 0x400, scoped, tag = 'output window, operand 6, single buffered']
    #allocation15 [shape = 'u8[1024]{0}', space=vmem, size = 0x400, scoped, tag = 'output window, operand 7, single buffered']
    #allocation16 [shape = 's32[1]{0}', space=sflag, size = 0x4, scoped, tag = 'scoped memory for tpu_custom_call.1']
    %14 = vsyncpa [#allocation3], 0
    %15 = vsyncpa [#allocation4], 0
    %16 = vsyncpa [#allocation7], 0
    %17 = vsyncpa [#allocation10], 0
    %18 = vsyncpa [#allocation13], 0
    %19 = vsyncpa [#allocation16], 0
    // Predicated region
    $region2: #{tpu_custom_call.1} parent=1 // pred_check
      _
    $region3: #{tpu_custom_call.1} parent=1 // pred_check_branch
      %21 = sbr.rel (0) target = $region5
    $region4: #{tpu_custom_call.1} parent=1 // pred_region
      %s23 = ssub.s32 128, 128
      %24 = vsyncadd [#allocation3], %s23
      %s25 = smul.addr %s13, 128
      %s26 = scalar_lea.hbm %s0, %s25
      %s28 = sshll.u32 [#allocation2], 4
      %s29 = int_to_ptr.vmem [resolvable:$true] %s28
      %31 = dma.hbm_to_vmem [thread:$0]  %s26, 128, %s29, [#allocation3]
    $region5: #{tpu_custom_call.1} parent=1 // pred_fallthru
      _
    // Predicated region
    $region6: #{tpu_custom_call.1} parent=1 // pred_check
      _
    $region7: #{tpu_custom_call.1} parent=1 // pred_check_branch
      %33 = sbr.rel (0) target = $region9
    $region8: #{tpu_custom_call.1} parent=1 // pred_region
      %34 = dma.done [#allocation3], 128
    $region9: #{tpu_custom_call.1} parent=1 // pred_fallthru
      _
    %v37 = vld [vmem:[#allocation2] sm:$0xff]
    %v38 = vadd.f32 %v37, 2.0
    %39 = vst [vmem:[#allocation5] sm:$0xff] %v38
    %v40 = vsub.f32 %v37, 1.0
    %41 = vst [vmem:[#allocation6] sm:$0xff] %v40
    %v42 = vmul.f32 %v37, 3.0
    %43 = vst [vmem:[#allocation8] sm:$0xff] %v42
    %v44 = vmul.f32 %v37, 0.5
    %45 = vst [vmem:[#allocation9] sm:$0xff] %v44
    %v46 = vmul.f32 %v37, %v37
    %47 = vst [vmem:[#allocation11] sm:$0xff] %v46
    %vm48 = vcmp.gt.f32.partialorder %v37, 1.0
    %vm49 = vmpackc.low %vm48, %vm48
    %vm50 = vmpackc.even %vm49, %vm49
    %v51 = vsel %vm50, 16843009, 0
    %52 = vst [vmem:[#allocation12] sm:$0x3] %v51
    %vm53 = vcmp.lt.f32.partialorder %v37, 5.0
    %vm54 = vmpackc.low %vm53, %vm53
    %vm55 = vmpackc.even %vm54, %vm54
    %v56 = vsel %vm55, 16843009, 0
    %57 = vst [vmem:[#allocation14] sm:$0x3] %v56
    %vm58 = vcmp.eq.f32.partialorder %v37, 3.0
    %vm59 = vmpackc.low %vm58, %vm58
    %vm60 = vmpackc.even %vm59, %vm59
    %v61 = vsel %vm60, 16843009, 0
    %62 = vst [vmem:[#allocation15] sm:$0x3] %v61
    // Predicated region
    $region10: #{tpu_custom_call.1} parent=1 // pred_check
      _
    $region11: #{tpu_custom_call.1} parent=1 // pred_check_branch
      %64 = sbr.rel (0) target = $region13
    $region12: #{tpu_custom_call.1} parent=1 // pred_region
      %s66 = ssub.s32 128, 128
      %67 = vsyncadd [#allocation4], %s66
      %s68 = smul.addr %s13, 128
      %s69 = scalar_lea.hbm %s1, %s68
      %s71 = sshll.u32 [#allocation5], 4
      %s72 = int_to_ptr.vmem [resolvable:$true] %s71
      %74 = dma.vmem_to_hbm [thread:$0]  %s72, 128, %s69, [#allocation4]
    $region13: #{tpu_custom_call.1} parent=1 // pred_fallthru
      _
    // Predicated region
    $region14: #{tpu_custom_call.1} parent=1 // pred_check
      _
    $region15: #{tpu_custom_call.1} parent=1 // pred_check_branch
      %76 = sbr.rel (0) target = $region17
    $region16: #{tpu_custom_call.1} parent=1 // pred_region
      %s78 = ssub.s32 128, 128
      %79 = vsyncadd [#allocation7], %s78
      %s80 = smul.addr %s13, 128
      %s81 = scalar_lea.hbm %s2, %s80
      %s83 = sshll.u32 [#allocation6], 4
      %s84 = int_to_ptr.vmem [resolvable:$true] %s83
      %86 = dma.vmem_to_hbm [thread:$0]  %s84, 128, %s81, [#allocation7]
    $region17: #{tpu_custom_call.1} parent=1 // pred_fallthru
      _
    // Predicated region
    $region18: #{tpu_custom_call.1} parent=1 // pred_check
      _
    $region19: #{tpu_custom_call.1} parent=1 // pred_check_branch
      %88 = sbr.rel (0) target = $region21
    $region20: #{tpu_custom_call.1} parent=1 // pred_region
      %s90 = ssub.s32 128, 128
      %91 = vsyncadd [#allocation7], %s90
      %s92 = smul.addr %s13, 128
      %s93 = scalar_lea.hbm %s3, %s92
      %s95 = sshll.u32 [#allocation8], 4
      %s96 = int_to_ptr.vmem [resolvable:$true] %s95
      %98 = dma.vmem_to_hbm [thread:$0]  %s96, 128, %s93, [#allocation7]
    $region21: #{tpu_custom_call.1} parent=1 // pred_fallthru
      _
    // Predicated region
    $region22: #{tpu_custom_call.1} parent=1 // pred_check
      _
    $region23: #{tpu_custom_call.1} parent=1 // pred_check_branch
      %100 = sbr.rel (0) target = $region25
    $region24: #{tpu_custom_call.1} parent=1 // pred_region
      %s102 = ssub.s32 128, 128
      %103 = vsyncadd [#allocation10], %s102
      %s104 = smul.addr %s13, 128
      %s105 = scalar_lea.hbm %s4, %s104
      %s107 = sshll.u32 [#allocation9], 4
      %s108 = int_to_ptr.vmem [resolvable:$true] %s107
      %110 = dma.vmem_to_hbm [thread:$0]  %s108, 128, %s105, [#allocation10]
    $region25: #{tpu_custom_call.1} parent=1 // pred_fallthru
      _
    // Predicated region
    $region26: #{tpu_custom_call.1} parent=1 // pred_check
      _
    $region27: #{tpu_custom_call.1} parent=1 // pred_check_branch
      %112 = sbr.rel (0) target = $region29
    $region28: #{tpu_custom_call.1} parent=1 // pred_region
      %s114 = ssub.s32 128, 128
      %115 = vsyncadd [#allocation10], %s114
      %s116 = smul.addr %s13, 128
      %s117 = scalar_lea.hbm %s5, %s116
      %s119 = sshll.u32 [#allocation11], 4
      %s120 = int_to_ptr.vmem [resolvable:$true] %s119
      %122 = dma.vmem_to_hbm [thread:$0]  %s120, 128, %s117, [#allocation10]
    $region29: #{tpu_custom_call.1} parent=1 // pred_fallthru
      _
    // Predicated region
    $region30: #{tpu_custom_call.1} parent=1 // pred_check
      _
    $region31: #{tpu_custom_call.1} parent=1 // pred_check_branch
      %124 = sbr.rel (0) target = $region33
    $region32: #{tpu_custom_call.1} parent=1 // pred_region
      %s126 = ssub.s32 32, 32
      %127 = vsyncadd [#allocation13], %s126
      %s128 = smul.addr %s13, 32
      %s129 = scalar_lea.hbm %s6, %s128
      %s131 = sshll.u32 [#allocation12], 4
      %s132 = int_to_ptr.vmem [resolvable:$true] %s131
      %134 = dma.vmem_to_hbm [thread:$0]  %s132, 32, %s129, [#allocation13]
    $region33: #{tpu_custom_call.1} parent=1 // pred_fallthru
      _
    // Predicated region
    $region34: #{tpu_custom_call.1} parent=1 // pred_check
      _
    $region35: #{tpu_custom_call.1} parent=1 // pred_check_branch
      %136 = sbr.rel (0) target = $region37
    $region36: #{tpu_custom_call.1} parent=1 // pred_region
      %s138 = ssub.s32 32, 32
      %139 = vsyncadd [#allocation13], %s138
      %s140 = smul.addr %s13, 32
      %s141 = scalar_lea.hbm %s7, %s140
      %s143 = sshll.u32 [#allocation14], 4
      %s144 = int_to_ptr.vmem [resolvable:$true] %s143
      %146 = dma.vmem_to_hbm [thread:$0]  %s144, 32, %s141, [#allocation13]
    $region37: #{tpu_custom_call.1} parent=1 // pred_fallthru
      _
    // Predicated region
    $region38: #{tpu_custom_call.1} parent=1 // pred_check
      _
    $region39: #{tpu_custom_call.1} parent=1 // pred_check_branch
      %148 = sbr.rel (0) target = $region41
    $region40: #{tpu_custom_call.1} parent=1 // pred_region
      %s150 = ssub.s32 32, 32
      %151 = vsyncadd [#allocation16], %s150
      %s152 = smul.addr %s13, 32
      %s153 = scalar_lea.hbm %s8, %s152
      %s155 = sshll.u32 [#allocation15], 4
      %s156 = int_to_ptr.vmem [resolvable:$true] %s155
      %158 = dma.vmem_to_hbm [thread:$0]  %s156, 32, %s153, [#allocation16]
    $region41: #{tpu_custom_call.1} parent=1 // pred_fallthru
      _
    // Predicated region
    $region42: #{tpu_custom_call.1} parent=1 // pred_check
      _
    $region43: #{tpu_custom_call.1} parent=1 // pred_check_branch
      %160 = sbr.rel (0) target = $region45
    $region44: #{tpu_custom_call.1} parent=1 // pred_region
      %161 = dma.done [#allocation4], 128
    $region45: #{tpu_custom_call.1} parent=1 // pred_fallthru
      _
    // Predicated region
    $region46: #{tpu_custom_call.1} parent=1 // pred_check
      _
    $region47: #{tpu_custom_call.1} parent=1 // pred_check_branch
      %163 = sbr.rel (0) target = $region49
    $region48: #{tpu_custom_call.1} parent=1 // pred_region
      %164 = dma.done [#allocation7], 128
    $region49: #{tpu_custom_call.1} parent=1 // pred_fallthru
      _
    // Predicated region
    $region50: #{tpu_custom_call.1} parent=1 // pred_check
      _
    $region51: #{tpu_custom_call.1} parent=1 // pred_check_branch
      %166 = sbr.rel (0) target = $region53
    $region52: #{tpu_custom_call.1} parent=1 // pred_region
      %167 = dma.done [#allocation7], 128
    $region53: #{tpu_custom_call.1} parent=1 // pred_fallthru
      _
    // Predicated region
    $region54: #{tpu_custom_call.1} parent=1 // pred_check
      _
    $region55: #{tpu_custom_call.1} parent=1 // pred_check_branch
      %169 = sbr.rel (0) target = $region57
    $region56: #{tpu_custom_call.1} parent=1 // pred_region
      %170 = dma.done [#allocation10], 128
    $region57: #{tpu_custom_call.1} parent=1 // pred_fallthru
      _
    // Predicated region
    $region58: #{tpu_custom_call.1} parent=1 // pred_check
      _
    $region59: #{tpu_custom_call.1} parent=1 // pred_check_branch
      %172 = sbr.rel (0) target = $region61
    $region60: #{tpu_custom_call.1} parent=1 // pred_region
      %173 = dma.done [#allocation10], 128
    $region61: #{tpu_custom_call.1} parent=1 // pred_fallthru
      _
    // Predicated region
    $region62: #{tpu_custom_call.1} parent=1 // pred_check
      _
    $region63: #{tpu_custom_call.1} parent=1 // pred_check_branch
      %175 = sbr.rel (0) target = $region65
    $region64: #{tpu_custom_call.1} parent=1 // pred_region
      %176 = dma.done [#allocation13], 32
    $region65: #{tpu_custom_call.1} parent=1 // pred_fallthru
      _
    // Predicated region
    $region66: #{tpu_custom_call.1} parent=1 // pred_check
      _
    $region67: #{tpu_custom_call.1} parent=1 // pred_check_branch
      %178 = sbr.rel (0) target = $region69
    $region68: #{tpu_custom_call.1} parent=1 // pred_region
      %179 = dma.done [#allocation13], 32
    $region69: #{tpu_custom_call.1} parent=1 // pred_fallthru
      _
    // Predicated region
    $region70: #{tpu_custom_call.1} parent=1 // pred_check
      _
    $region71: #{tpu_custom_call.1} parent=1 // pred_check_branch
      %181 = sbr.rel (0) target = $region73
    $region72: #{tpu_custom_call.1} parent=1 // pred_region
      %182 = dma.done [#allocation16], 32
    $region73: #{tpu_custom_call.1} parent=1 // pred_fallthru
      _
    %183 = vsyncpa [#allocation3], 1
    %184 = vsyncpa [#allocation4], 1
    %185 = vsyncpa [#allocation7], 1
    %186 = vsyncpa [#allocation10], 1
    %187 = vsyncpa [#allocation13], 1
    %188 = vsyncpa [#allocation16], 1

// kernel: tpu_custom_call.1
$region0: #{tpu_custom_call.1}
  #allocation0 [shape = 'u32[]', space=smem, size = 0x4, offset = 0x4, fixed_abs, tag = 'smem constant byte address 0x4 - core index']
  #allocation1 [shape = 'u32[144,128]{1,0:T(1,128)}', space=vmem, size = 0x12000, scoped, tag = 'internal scratch']
  %s0 = inlined_call_operand.hbm [shape: f32[8,128], index: 0, kind: input, shape index: {}]
  %s1 = inlined_call_operand.hbm [shape: f32[8,128], index: 1, kind: output, shape index: {0}]
  %s2 = inlined_call_operand.hbm [shape: f32[8,128], index: 2, kind: output, shape index: {1}]
  %s3 = inlined_call_operand.hbm [shape: f32[8,128], index: 3, kind: output, shape index: {2}]
  %s4 = inlined_call_operand.hbm [shape: f32[8,128], index: 4, kind: output, shape index: {3}]
  %s5 = inlined_call_operand.hbm [shape: f32[8,128], index: 5, kind: output, shape index: {4}]
  %s6 = inlined_call_operand.hbm [shape: s8[8,128], index: 6, kind: output, shape index: {5}]
  %s7 = inlined_call_operand.hbm [shape: s8[8,128], index: 7, kind: output, shape index: {6}]
  %s8 = inlined_call_operand.hbm [shape: s8[8,128], index: 8, kind: output, shape index: {7}]
  %9 = xla_tuple %s1, %s2, %s3, %s4, %s5, %s6, %s7, %s8
  %s10 = sld [smem:[#allocation0]]
  $region74: #{tpu_custom_call.1} parent=0
    _
  %s12 = ssub.s32 1, %s10
  %s13 = scalar_select 0, %s12, %s10
  $region1: #{tpu_custom_call.1} parent=0
    #allocation2 [shape = 'u8[4096]{0}', space=vmem, size = 0x1000, scoped, tag = 'input window, operand 0, single buffered']
    #allocation3 [shape = 's32[1]{0}', space=sflag, size = 0x4, scoped, tag = 'scoped memory for tpu_custom_call.1']
    #allocation4 [shape = 's32[1]{0}', space=sflag, size = 0x4, scoped, tag = 'scoped memory for tpu_custom_call.1']
    #allocation5 [shape = 'u8[4096]{0}', space=vmem, size = 0x1000, scoped, tag = 'output window, operand 0, single buffered']
    #allocation6 [shape = 'u8[4096]{0}', space=vmem, size = 0x1000, scoped, tag = 'output window, operand 1, single buffered']
    #allocation7 [shape = 's32[1]{0}', space=sflag, size = 0x4, scoped, tag = 'scoped memory for tpu_custom_call.1']
    #allocation8 [shape = 'u8[4096]{0}', space=vmem, size = 0x1000, scoped, tag = 'output window, operand 2, single buffered']
    #allocation9 [shape = 'u8[4096]{0}', space=vmem, size = 0x1000, scoped, tag = 'output window, operand 3, single buffered']
    #allocation10 [shape = 's32[1]{0}', space=sflag, size = 0x4, scoped, tag = 'scoped memory for tpu_custom_call.1']
    #allocation11 [shape = 'u8[4096]{0}', space=vmem, size = 0x1000, scoped, tag = 'output window, operand 4, single buffered']
    #allocation12 [shape = 'u8[1024]{0}', space=vmem, size = 0x400, scoped, tag = 'output window, operand 5, single buffered']
    #allocation13 [shape = 's32[1]{0}', space=sflag, size = 0x4, scoped, tag = 'scoped memory for tpu_custom_call.1']
    #allocation14 [shape = 'u8[1024]{0}', space=vmem, size = 0x400, scoped, tag = 'output window, operand 6, single buffered']
    #allocation15 [shape = 'u8[1024]{0}', space=vmem, size = 0x400, scoped, tag = 'output window, operand 7, single buffered']
    #allocation16 [shape = 's32[1]{0}', space=sflag, size = 0x4, scoped, tag = 'scoped memory for tpu_custom_call.1']
    %14 = vsyncpa [#allocation3], 0
    %15 = vsyncpa [#allocation4], 0
    %16 = vsyncpa [#allocation7], 0
    %17 = vsyncpa [#allocation10], 0
    %18 = vsyncpa [#allocation13], 0
    %19 = vsyncpa [#allocation16], 0
    // Predicated region
    $region2: #{tpu_custom_call.1} parent=1 // pred_check
      _
    $region3: #{tpu_custom_call.1} parent=1 // pred_check_branch
      %21 = sbr.rel (0) target = $region5
    $region4: #{tpu_custom_call.1} parent=1 // pred_region
      %s23 = ssub.s32 128, 128
      %24 = vsyncadd [#allocation3], %s23
      %s26 = sshll.u32 [#allocation2], 4
      %s27 = int_to_ptr.vmem [resolvable:$true] %s26
      %29 = dma.hbm_to_vmem [thread:$0]  %s0, 128, %s27, [#allocation3]
    $region5: #{tpu_custom_call.1} parent=1 // pred_fallthru
      _
    // Predicated region
    $region6: #{tpu_custom_call.1} parent=1 // pred_check
      _
    $region7: #{tpu_custom_call.1} parent=1 // pred_check_branch
      %31 = sbr.rel (0) target = $region9
    $region8: #{tpu_custom_call.1} parent=1 // pred_region
      %32 = dma.done [#allocation3], 128
    $region9: #{tpu_custom_call.1} parent=1 // pred_fallthru
      _
    %v35 = vld [vmem:[#allocation2] sm:$0xff]
    %v36 = vadd.f32 %v35, 2.0
    %37 = vst [vmem:[#allocation5] sm:$0xff] %v36
    %v38 = vsub.f32 %v35, 1.0
    %39 = vst [vmem:[#allocation6] sm:$0xff] %v38
    %v40 = vmul.f32 %v35, 3.0
    %41 = vst [vmem:[#allocation8] sm:$0xff] %v40
    %v42 = vmul.f32 %v35, 0.5
    %43 = vst [vmem:[#allocation9] sm:$0xff] %v42
    %v44 = vmul.f32 %v35, %v35
    %45 = vst [vmem:[#allocation11] sm:$0xff] %v44
    %vm46 = vcmp.gt.f32.partialorder %v35, 1.0
    %vm47 = vmpackc.low %vm46, %vm46
    %vm48 = vmpackc.even %vm47, %vm47
    %v49 = vsel %vm48, 16843009, 0
    %50 = vst [vmem:[#allocation12] sm:$0x3] %v49
    %vm51 = vcmp.lt.f32.partialorder %v35, 5.0
    %vm52 = vmpackc.low %vm51, %vm51
    %vm53 = vmpackc.even %vm52, %vm52
    %v54 = vsel %vm53, 16843009, 0
    %55 = vst [vmem:[#allocation14] sm:$0x3] %v54
    %vm56 = vcmp.eq.f32.partialorder %v35, 3.0
    %vm57 = vmpackc.low %vm56, %vm56
    %vm58 = vmpackc.even %vm57, %vm57
    %v59 = vsel %vm58, 16843009, 0
    %60 = vst [vmem:[#allocation15] sm:$0x3] %v59
    // Predicated region
    $region10: #{tpu_custom_call.1} parent=1 // pred_check
      _
    $region11: #{tpu_custom_call.1} parent=1 // pred_check_branch
      %62 = sbr.rel (0) target = $region13
    $region12: #{tpu_custom_call.1} parent=1 // pred_region
      %s64 = ssub.s32 128, 128
      %65 = vsyncadd [#allocation4], %s64
      %s67 = sshll.u32 [#allocation5], 4
      %s68 = int_to_ptr.vmem [resolvable:$true] %s67
      %70 = dma.vmem_to_hbm [thread:$0]  %s68, 128, %s1, [#allocation4]
    $region13: #{tpu_custom_call.1} parent=1 // pred_fallthru
      _
    // Predicated region
    $region14: #{tpu_custom_call.1} parent=1 // pred_check
      _
    $region15: #{tpu_custom_call.1} parent=1 // pred_check_branch
      %72 = sbr.rel (0) target = $region17
    $region16: #{tpu_custom_call.1} parent=1 // pred_region
      %s74 = ssub.s32 128, 128
      %75 = vsyncadd [#allocation7], %s74
      %s77 = sshll.u32 [#allocation6], 4
      %s78 = int_to_ptr.vmem [resolvable:$true] %s77
      %80 = dma.vmem_to_hbm [thread:$0]  %s78, 128, %s2, [#allocation7]
    $region17: #{tpu_custom_call.1} parent=1 // pred_fallthru
      _
    // Predicated region
    $region18: #{tpu_custom_call.1} parent=1 // pred_check
      _
    $region19: #{tpu_custom_call.1} parent=1 // pred_check_branch
      %82 = sbr.rel (0) target = $region21
    $region20: #{tpu_custom_call.1} parent=1 // pred_region
      %s84 = ssub.s32 128, 128
      %85 = vsyncadd [#allocation7], %s84
      %s87 = sshll.u32 [#allocation8], 4
      %s88 = int_to_ptr.vmem [resolvable:$true] %s87
      %90 = dma.vmem_to_hbm [thread:$0]  %s88, 128, %s3, [#allocation7]
    $region21: #{tpu_custom_call.1} parent=1 // pred_fallthru
      _
    // Predicated region
    $region22: #{tpu_custom_call.1} parent=1 // pred_check
      _
    $region23: #{tpu_custom_call.1} parent=1 // pred_check_branch
      %92 = sbr.rel (0) target = $region25
    $region24: #{tpu_custom_call.1} parent=1 // pred_region
      %s94 = ssub.s32 128, 128
      %95 = vsyncadd [#allocation10], %s94
      %s97 = sshll.u32 [#allocation9], 4
      %s98 = int_to_ptr.vmem [resolvable:$true] %s97
      %100 = dma.vmem_to_hbm [thread:$0]  %s98, 128, %s4, [#allocation10]
    $region25: #{tpu_custom_call.1} parent=1 // pred_fallthru
      _
    // Predicated region
    $region26: #{tpu_custom_call.1} parent=1 // pred_check
      _
    $region27: #{tpu_custom_call.1} parent=1 // pred_check_branch
      %102 = sbr.rel (0) target = $region29
    $region28: #{tpu_custom_call.1} parent=1 // pred_region
      %s104 = ssub.s32 128, 128
      %105 = vsyncadd [#allocation10], %s104
      %s107 = sshll.u32 [#allocation11], 4
      %s108 = int_to_ptr.vmem [resolvable:$true] %s107
      %110 = dma.vmem_to_hbm [thread:$0]  %s108, 128, %s5, [#allocation10]
    $region29: #{tpu_custom_call.1} parent=1 // pred_fallthru
      _
    // Predicated region
    $region30: #{tpu_custom_call.1} parent=1 // pred_check
      _
    $region31: #{tpu_custom_call.1} parent=1 // pred_check_branch
      %112 = sbr.rel (0) target = $region33
    $region32: #{tpu_custom_call.1} parent=1 // pred_region
      %s114 = ssub.s32 32, 32
      %115 = vsyncadd [#allocation13], %s114
      %s117 = sshll.u32 [#allocation12], 4
      %s118 = int_to_ptr.vmem [resolvable:$true] %s117
      %120 = dma.vmem_to_hbm [thread:$0]  %s118, 32, %s6, [#allocation13]
    $region33: #{tpu_custom_call.1} parent=1 // pred_fallthru
      _
    // Predicated region
    $region34: #{tpu_custom_call.1} parent=1 // pred_check
      _
    $region35: #{tpu_custom_call.1} parent=1 // pred_check_branch
      %122 = sbr.rel (0) target = $region37
    $region36: #{tpu_custom_call.1} parent=1 // pred_region
      %s124 = ssub.s32 32, 32
      %125 = vsyncadd [#allocation13], %s124
      %s127 = sshll.u32 [#allocation14], 4
      %s128 = int_to_ptr.vmem [resolvable:$true] %s127
      %130 = dma.vmem_to_hbm [thread:$0]  %s128, 32, %s7, [#allocation13]
    $region37: #{tpu_custom_call.1} parent=1 // pred_fallthru
      _
    // Predicated region
    $region38: #{tpu_custom_call.1} parent=1 // pred_check
      _
    $region39: #{tpu_custom_call.1} parent=1 // pred_check_branch
      %132 = sbr.rel (0) target = $region41
    $region40: #{tpu_custom_call.1} parent=1 // pred_region
      %s134 = ssub.s32 32, 32
      %135 = vsyncadd [#allocation16], %s134
      %s137 = sshll.u32 [#allocation15], 4
      %s138 = int_to_ptr.vmem [resolvable:$true] %s137
      %140 = dma.vmem_to_hbm [thread:$0]  %s138, 32, %s8, [#allocation16]
    $region41: #{tpu_custom_call.1} parent=1 // pred_fallthru
      _
    // Predicated region
    $region42: #{tpu_custom_call.1} parent=1 // pred_check
      _
    $region43: #{tpu_custom_call.1} parent=1 // pred_check_branch
      %142 = sbr.rel (0) target = $region45
    $region44: #{tpu_custom_call.1} parent=1 // pred_region
      %143 = dma.done [#allocation4], 128
    $region45: #{tpu_custom_call.1} parent=1 // pred_fallthru
      _
    // Predicated region
    $region46: #{tpu_custom_call.1} parent=1 // pred_check
      _
    $region47: #{tpu_custom_call.1} parent=1 // pred_check_branch
      %145 = sbr.rel (0) target = $region49
    $region48: #{tpu_custom_call.1} parent=1 // pred_region
      %146 = dma.done [#allocation7], 128
    $region49: #{tpu_custom_call.1} parent=1 // pred_fallthru
      _
    // Predicated region
    $region50: #{tpu_custom_call.1} parent=1 // pred_check
      _
    $region51: #{tpu_custom_call.1} parent=1 // pred_check_branch
      %148 = sbr.rel (0) target = $region53
    $region52: #{tpu_custom_call.1} parent=1 // pred_region
      %149 = dma.done [#allocation7], 128
    $region53: #{tpu_custom_call.1} parent=1 // pred_fallthru
      _
    // Predicated region
    $region54: #{tpu_custom_call.1} parent=1 // pred_check
      _
    $region55: #{tpu_custom_call.1} parent=1 // pred_check_branch
      %151 = sbr.rel (0) target = $region57
    $region56: #{tpu_custom_call.1} parent=1 // pred_region
      %152 = dma.done [#allocation10], 128
    $region57: #{tpu_custom_call.1} parent=1 // pred_fallthru
      _
    // Predicated region
    $region58: #{tpu_custom_call.1} parent=1 // pred_check
      _
    $region59: #{tpu_custom_call.1} parent=1 // pred_check_branch
      %154 = sbr.rel (0) target = $region61
    $region60: #{tpu_custom_call.1} parent=1 // pred_region
      %155 = dma.done [#allocation10], 128
    $region61: #{tpu_custom_call.1} parent=1 // pred_fallthru
      _
    // Predicated region
    $region62: #{tpu_custom_call.1} parent=1 // pred_check
      _
    $region63: #{tpu_custom_call.1} parent=1 // pred_check_branch
      %157 = sbr.rel (0) target = $region65
    $region64: #{tpu_custom_call.1} parent=1 // pred_region
      %158 = dma.done [#allocation13], 32
    $region65: #{tpu_custom_call.1} parent=1 // pred_fallthru
      _
    // Predicated region
    $region66: #{tpu_custom_call.1} parent=1 // pred_check
      _
    $region67: #{tpu_custom_call.1} parent=1 // pred_check_branch
      %160 = sbr.rel (0) target = $region69
    $region68: #{tpu_custom_call.1} parent=1 // pred_region
      %161 = dma.done [#allocation13], 32
    $region69: #{tpu_custom_call.1} parent=1 // pred_fallthru
      _
    // Predicated region
    $region70: #{tpu_custom_call.1} parent=1 // pred_check
      _
    $region71: #{tpu_custom_call.1} parent=1 // pred_check_branch
      %163 = sbr.rel (0) target = $region73
    $region72: #{tpu_custom_call.1} parent=1 // pred_region
      %164 = dma.done [#allocation16], 32
    $region73: #{tpu_custom_call.1} parent=1 // pred_fallthru
      _
    %165 = vsyncpa [#allocation3], 1
    %166 = vsyncpa [#allocation4], 1
    %167 = vsyncpa [#allocation7], 1
    %168 = vsyncpa [#allocation10], 1
    %169 = vsyncpa [#allocation13], 1
    %170 = vsyncpa [#allocation16], 1

// kernel: tpu_custom_call.1
$region0: #{tpu_custom_call.1}
  #allocation0 [shape = 'u32[]', space=smem, size = 0x4, offset = 0x4, fixed_abs, tag = 'smem constant byte address 0x4 - core index']
  #allocation1 [shape = 'u32[144,128]{1,0:T(1,128)}', space=vmem, size = 0x12000, scoped, tag = 'internal scratch']
  %s0 = inlined_call_operand.hbm [shape: f32[2,1024], index: 0, kind: input, shape index: {}]
  %s1 = inlined_call_operand.hbm [shape: f32[2,1024], index: 1, kind: output, shape index: {0}]
  %s2 = inlined_call_operand.hbm [shape: f32[2,1024], index: 2, kind: output, shape index: {1}]
  %s3 = inlined_call_operand.hbm [shape: f32[2,1024], index: 3, kind: output, shape index: {2}]
  %s4 = inlined_call_operand.hbm [shape: f32[2,1024], index: 4, kind: output, shape index: {3}]
  %s5 = inlined_call_operand.hbm [shape: f32[2,1024], index: 5, kind: output, shape index: {4}]
  %s6 = inlined_call_operand.hbm [shape: s8[2,1024], index: 6, kind: output, shape index: {5}]
  %s7 = inlined_call_operand.hbm [shape: s8[2,1024], index: 7, kind: output, shape index: {6}]
  %s8 = inlined_call_operand.hbm [shape: s8[2,1024], index: 8, kind: output, shape index: {7}]
  %9 = xla_tuple %s1, %s2, %s3, %s4, %s5, %s6, %s7, %s8
  %s10 = sld [smem:[#allocation0]]
  $region74: #{tpu_custom_call.1} parent=0
    _
  %s12 = ssub.s32 1, %s10
  %s13 = scalar_select 0, %s12, %s10
  $region1: #{tpu_custom_call.1} parent=0
    #allocation2 [shape = 'u8[8192]{0}', space=vmem, size = 0x2000, scoped, tag = 'input window, operand 0, single buffered']
    #allocation3 [shape = 's32[1]{0}', space=sflag, size = 0x4, scoped, tag = 'scoped memory for tpu_custom_call.1']
    #allocation4 [shape = 's32[1]{0}', space=sflag, size = 0x4, scoped, tag = 'scoped memory for tpu_custom_call.1']
    #allocation5 [shape = 'u8[8192]{0}', space=vmem, size = 0x2000, scoped, tag = 'output window, operand 0, single buffered']
    #allocation6 [shape = 'u8[8192]{0}', space=vmem, size = 0x2000, scoped, tag = 'output window, operand 1, single buffered']
    #allocation7 [shape = 's32[1]{0}', space=sflag, size = 0x4, scoped, tag = 'scoped memory for tpu_custom_call.1']
    #allocation8 [shape = 'u8[8192]{0}', space=vmem, size = 0x2000, scoped, tag = 'output window, operand 2, single buffered']
    #allocation9 [shape = 'u8[8192]{0}', space=vmem, size = 0x2000, scoped, tag = 'output window, operand 3, single buffered']
    #allocation10 [shape = 's32[1]{0}', space=sflag, size = 0x4, scoped, tag = 'scoped memory for tpu_custom_call.1']
    #allocation11 [shape = 'u8[8192]{0}', space=vmem, size = 0x2000, scoped, tag = 'output window, operand 4, single buffered']
    #allocation12 [shape = 'u8[4096]{0}', space=vmem, size = 0x1000, scoped, tag = 'output window, operand 5, single buffered']
    #allocation13 [shape = 's32[1]{0}', space=sflag, size = 0x4, scoped, tag = 'scoped memory for tpu_custom_call.1']
    #allocation14 [shape = 'u8[4096]{0}', space=vmem, size = 0x1000, scoped, tag = 'output window, operand 6, single buffered']
    #allocation15 [shape = 'u8[4096]{0}', space=vmem, size = 0x1000, scoped, tag = 'output window, operand 7, single buffered']
    #allocation16 [shape = 's32[1]{0}', space=sflag, size = 0x4, scoped, tag = 'scoped memory for tpu_custom_call.1']
    %14 = vsyncpa [#allocation3], 0
    %15 = vsyncpa [#allocation4], 0
    %16 = vsyncpa [#allocation7], 0
    %17 = vsyncpa [#allocation10], 0
    %18 = vsyncpa [#allocation13], 0
    %19 = vsyncpa [#allocation16], 0
    // Predicated region
    $region2: #{tpu_custom_call.1} parent=1 // pred_check
      _
    $region3: #{tpu_custom_call.1} parent=1 // pred_check_branch
      %21 = sbr.rel (0) target = $region5
    $region4: #{tpu_custom_call.1} parent=1 // pred_region
      %s23 = ssub.s32 256, 256
      %24 = vsyncadd [#allocation3], %s23
      %s26 = sshll.u32 [#allocation2], 4
      %s27 = int_to_ptr.vmem [resolvable:$true] %s26
      %29 = dma.hbm_to_vmem [thread:$0]  %s0, 256, %s27, [#allocation3]
    $region5: #{tpu_custom_call.1} parent=1 // pred_fallthru
      _
    // Predicated region
    $region6: #{tpu_custom_call.1} parent=1 // pred_check
      _
    $region7: #{tpu_custom_call.1} parent=1 // pred_check_branch
      %31 = sbr.rel (0) target = $region9
    $region8: #{tpu_custom_call.1} parent=1 // pred_region
      %32 = dma.done [#allocation3], 256
    $region9: #{tpu_custom_call.1} parent=1 // pred_fallthru
      _
    %v35 = vld [vmem:[#allocation2] sm:$0xff]
    %v36 = vld [vmem:[#allocation2 + $0x8] sm:$0xff]
    %v37 = vadd.f32 %v35, 2.0
    %v38 = vadd.f32 %v36, 2.0
    %39 = vst [vmem:[#allocation5] sm:$0xff] %v37
    %40 = vst [vmem:[#allocation5 + $0x8] sm:$0xff] %v38
    %v41 = vsub.f32 %v35, 1.0
    %v42 = vsub.f32 %v36, 1.0
    %43 = vst [vmem:[#allocation6] sm:$0xff] %v41
    %44 = vst [vmem:[#allocation6 + $0x8] sm:$0xff] %v42
    %v45 = vmul.f32 %v35, 3.0
    %v46 = vmul.f32 %v36, 3.0
    %47 = vst [vmem:[#allocation8] sm:$0xff] %v45
    %48 = vst [vmem:[#allocation8 + $0x8] sm:$0xff] %v46
    %v49 = vmul.f32 %v35, 0.5
    %v50 = vmul.f32 %v36, 0.5
    %51 = vst [vmem:[#allocation9] sm:$0xff] %v49
    %52 = vst [vmem:[#allocation9 + $0x8] sm:$0xff] %v50
    %v53 = vmul.f32 %v35, %v35
    %v54 = vmul.f32 %v36, %v36
    %55 = vst [vmem:[#allocation11] sm:$0xff] %v53
    %56 = vst [vmem:[#allocation11 + $0x8] sm:$0xff] %v54
    %vm57 = vcmp.gt.f32.partialorder %v35, 1.0
    %vm58 = vcmp.gt.f32.partialorder %v36, 1.0
    %v59 = vsel %vm57, 1, 0
    %v60 = vsel %vm58, 1, 0
    %v61 = vcombine.high %v59, %v59
    %v63 = vunpack.c.l.s4 1983009808
    %v64 = vunpack.c.0.s8 %v63
    %v65 = vlaneseq
    %v66 = vshrl.u32 %v65, 7
    %v67 = vsub.s32 %v64, %v66
    %v68 = vrot.slane %v59, %v67
    %v70 = vunpack.c.l.s4 1983009808
    %v71 = vunpack.c.0.s8 %v70
    %v72 = vlaneseq
    %v73 = vshrl.u32 %v72, 7
    %v74 = vsub.s32 %v71, %v73
    %v75 = vrot.slane %v61, %v74
    %v76 = vcombine.high %v60, %v60
    %v78 = vunpack.c.l.s4 1983009808
    %v79 = vunpack.c.0.s8 %v78
    %v80 = vlaneseq
    %v81 = vshrl.u32 %v80, 7
    %v82 = vsub.s32 %v79, %v81
    %v83 = vrot.slane %v60, %v82
    %v85 = vunpack.c.l.s4 1983009808
    %v86 = vunpack.c.0.s8 %v85
    %v87 = vlaneseq
    %v88 = vshrl.u32 %v87, 7
    %v89 = vsub.s32 %v86, %v88
    %v90 = vrot.slane %v76, %v89
    %vm91 = vcmp.ne.s32.totalorder %v68, 0
    %vm92 = vcmp.ne.s32.totalorder %v75, 0
    %vm93 = vcmp.ne.s32.totalorder %v83, 0
    %vm94 = vcmp.ne.s32.totalorder %v90, 0
    %v95 = vsel %vm91, 1, 0
    %v96 = vsel %vm92, 1, 0
    %v97 = vsel %vm93, 1, 0
    %v98 = vsel %vm94, 1, 0
    %v99 = vpack.c.b16 %v96, %v95
    %v100 = vpack.c.b16 %v98, %v97
    %v101 = vpack.c.b8 %v100, %v99
    %vm102 = vnez %v101
    %v103 = vsel %vm102, 16843009, 0
    %v104 = vcombine.high %v103, %v103
    %v106 = vunpack.c.l.s4 1966171168
    %v107 = vunpack.c.0.s8 %v106
    %v108 = vlaneseq
    %v109 = vshrl.u32 %v108, 7
    %v110 = vsub.s32 %v107, %v109
    %v111 = vrot.slane %v103, %v110
    %v113 = vunpack.c.l.s4 1966171168
    %v114 = vunpack.c.0.s8 %v113
    %v115 = vlaneseq
    %v116 = vshrl.u32 %v115, 7
    %v117 = vsub.s32 %v114, %v116
    %v118 = vrot.slane %v104, %v117
    %v119 = vcombine.high %v111, %v111
    %v120 = vcombine.high %v118, %v118
    %v122 = vunpack.c.l.s4 1966171168
    %v123 = vunpack.c.0.s8 %v122
    %v124 = vlaneseq
    %v125 = vshrl.u32 %v124, 7
    %v126 = vsub.s32 %v123, %v125
    %v127 = vrot.slane %v111, %v126
    %v129 = vunpack.c.l.s4 1966171168
    %v130 = vunpack.c.0.s8 %v129
    %v131 = vlaneseq
    %v132 = vshrl.u32 %v131, 7
    %v133 = vsub.s32 %v130, %v132
    %v134 = vrot.slane %v118, %v133
    %v136 = vunpack.c.l.s4 1966171168
    %v137 = vunpack.c.0.s8 %v136
    %v138 = vlaneseq
    %v139 = vshrl.u32 %v138, 7
    %v140 = vsub.s32 %v137, %v139
    %v141 = vrot.slane %v119, %v140
    %v143 = vunpack.c.l.s4 1966171168
    %v144 = vunpack.c.0.s8 %v143
    %v145 = vlaneseq
    %v146 = vshrl.u32 %v145, 7
    %v147 = vsub.s32 %v144, %v146
    %v148 = vrot.slane %v120, %v147
    %v149 = vcombine.high %v127, %v127
    %v150 = vcombine.high %v134, %v134
    %v151 = vcombine.high %v141, %v141
    %v152 = vcombine.high %v148, %v148
    %vm153 = vnez %v127
    %vm154 = vnez %v141
    %vm155 = vnez %v149
    %vm156 = vnez %v151
    %vm157 = vnez %v134
    %vm158 = vnez %v148
    %vm159 = vnez %v150
    %vm160 = vnez %v152
    %v161 = vsel %vm153, 16843009, 0
    %v162 = vsel %vm154, 16843009, 0
    %v163 = vsel %vm155, 16843009, 0
    %v164 = vsel %vm156, 16843009, 0
    %v165 = vsel %vm157, 16843009, 0
    %v166 = vsel %vm158, 16843009, 0
    %v167 = vsel %vm159, 16843009, 0
    %v168 = vsel %vm160, 16843009, 0
    %v169 = vcombine.low %v161, %v162
    %v170 = vcombine.low %v163, %v164
    %v171 = vcombine.low %v165, %v166
    %v172 = vcombine.low %v167, %v168
    %v174 = vunpack.c.l.s4 1966171168
    %v175 = vunpack.c.0.s8 %v174
    %v176 = vlaneseq
    %v177 = vshrl.u32 %v176, 7
    %v178 = vsub.s32 %v175, %v177
    %v179 = vrot.slane %v169, %v178
    %v181 = vunpack.c.l.s4 1966171168
    %v182 = vunpack.c.0.s8 %v181
    %v183 = vlaneseq
    %v184 = vshrl.u32 %v183, 7
    %v185 = vsub.s32 %v182, %v184
    %v186 = vrot.slane %v170, %v185
    %v188 = vunpack.c.l.s4 1966171168
    %v189 = vunpack.c.0.s8 %v188
    %v190 = vlaneseq
    %v191 = vshrl.u32 %v190, 7
    %v192 = vsub.s32 %v189, %v191
    %v193 = vrot.slane %v171, %v192
    %v195 = vunpack.c.l.s4 1966171168
    %v196 = vunpack.c.0.s8 %v195
    %v197 = vlaneseq
    %v198 = vshrl.u32 %v197, 7
    %v199 = vsub.s32 %v196, %v198
    %v200 = vrot.slane %v172, %v199
    %v201 = vcombine.low %v179, %v186
    %v202 = vcombine.low %v193, %v200
    %v204 = vunpack.c.l.s4 1966171168
    %v205 = vunpack.c.0.s8 %v204
    %v206 = vlaneseq
    %v207 = vshrl.u32 %v206, 7
    %v208 = vsub.s32 %v205, %v207
    %v209 = vrot.slane %v201, %v208
    %v211 = vunpack.c.l.s4 1966171168
    %v212 = vunpack.c.0.s8 %v211
    %v213 = vlaneseq
    %v214 = vshrl.u32 %v213, 7
    %v215 = vsub.s32 %v212, %v214
    %v216 = vrot.slane %v202, %v215
    %v217 = vcombine.low %v209, %v216
    %vm218 = vcmask 1040384
    %vm219 = vsmask.f32 256
    %vm220 = vmand %vm218, %vm219
    %vm221 = vcmask 1041409
    %vm222 = vsmask.f32 1280
    %vm223 = vmand %vm221, %vm222
    %vm224 = vmor %vm223, %vm220
    %vm225 = vcmask 1042434
    %vm226 = vsmask.f32 2304
    %vm227 = vmand %vm225, %vm226
    %vm228 = vmor %vm227, %vm224
    %vm229 = vcmask 1043459
    %vm230 = vsmask.f32 3328
    %vm231 = vmand %vm229, %vm230
    %vm232 = vmor %vm231, %vm228
    %vm233 = vcmask 1044484
    %vm234 = vsmask.f32 4352
    %vm235 = vmand %vm233, %vm234
    %vm236 = vmor %vm235, %vm232
    %vm237 = vcmask 1045509
    %vm238 = vsmask.f32 5376
    %vm239 = vmand %vm237, %vm238
    %vm240 = vmor %vm239, %vm236
    %vm241 = vcmask 1046534
    %vm242 = vsmask.f32 6400
    %vm243 = vmand %vm241, %vm242
    %vm244 = vmor %vm243, %vm240
    %vm245 = vcmask 1047559
    %vm246 = vsmask.f32 7424
    %vm247 = vmand %vm245, %vm246
    %vm248 = vmor %vm247, %vm244
    %v249 = vld [vmem:[#allocation12] sm:$0xff]
    %v250 = vsel %vm248, %v217, %v249
    %251 = vst [vmem:[#allocation12] sm:$0xff] %v250
    %vm252 = vcmp.lt.f32.partialorder %v35, 5.0
    %vm253 = vcmp.lt.f32.partialorder %v36, 5.0
    %v254 = vsel %vm252, 1, 0
    %v255 = vsel %vm253, 1, 0
    %v256 = vcombine.high %v254, %v254
    %v258 = vunpack.c.l.s4 1983009808
    %v259 = vunpack.c.0.s8 %v258
    %v260 = vlaneseq
    %v261 = vshrl.u32 %v260, 7
    %v262 = vsub.s32 %v259, %v261
    %v263 = vrot.slane %v254, %v262
    %v265 = vunpack.c.l.s4 1983009808
    %v266 = vunpack.c.0.s8 %v265
    %v267 = vlaneseq
    %v268 = vshrl.u32 %v267, 7
    %v269 = vsub.s32 %v266, %v268
    %v270 = vrot.slane %v256, %v269
    %v271 = vcombine.high %v255, %v255
    %v273 = vunpack.c.l.s4 1983009808
    %v274 = vunpack.c.0.s8 %v273
    %v275 = vlaneseq
    %v276 = vshrl.u32 %v275, 7
    %v277 = vsub.s32 %v274, %v276
    %v278 = vrot.slane %v255, %v277
    %v280 = vunpack.c.l.s4 1983009808
    %v281 = vunpack.c.0.s8 %v280
    %v282 = vlaneseq
    %v283 = vshrl.u32 %v282, 7
    %v284 = vsub.s32 %v281, %v283
    %v285 = vrot.slane %v271, %v284
    %vm286 = vcmp.ne.s32.totalorder %v263, 0
    %vm287 = vcmp.ne.s32.totalorder %v270, 0
    %vm288 = vcmp.ne.s32.totalorder %v278, 0
    %vm289 = vcmp.ne.s32.totalorder %v285, 0
    %v290 = vsel %vm286, 1, 0
    %v291 = vsel %vm287, 1, 0
    %v292 = vsel %vm288, 1, 0
    %v293 = vsel %vm289, 1, 0
    %v294 = vpack.c.b16 %v291, %v290
    %v295 = vpack.c.b16 %v293, %v292
    %v296 = vpack.c.b8 %v295, %v294
    %vm297 = vnez %v296
    %v298 = vsel %vm297, 16843009, 0
    %v299 = vcombine.high %v298, %v298
    %v301 = vunpack.c.l.s4 1966171168
    %v302 = vunpack.c.0.s8 %v301
    %v303 = vlaneseq
    %v304 = vshrl.u32 %v303, 7
    %v305 = vsub.s32 %v302, %v304
    %v306 = vrot.slane %v298, %v305
    %v308 = vunpack.c.l.s4 1966171168
    %v309 = vunpack.c.0.s8 %v308
    %v310 = vlaneseq
    %v311 = vshrl.u32 %v310, 7
    %v312 = vsub.s32 %v309, %v311
    %v313 = vrot.slane %v299, %v312
    %v314 = vcombine.high %v306, %v306
    %v315 = vcombine.high %v313, %v313
    %v317 = vunpack.c.l.s4 1966171168
    %v318 = vunpack.c.0.s8 %v317
    %v319 = vlaneseq
    %v320 = vshrl.u32 %v319, 7
    %v321 = vsub.s32 %v318, %v320
    %v322 = vrot.slane %v306, %v321
    %v324 = vunpack.c.l.s4 1966171168
    %v325 = vunpack.c.0.s8 %v324
    %v326 = vlaneseq
    %v327 = vshrl.u32 %v326, 7
    %v328 = vsub.s32 %v325, %v327
    %v329 = vrot.slane %v313, %v328
    %v331 = vunpack.c.l.s4 1966171168
    %v332 = vunpack.c.0.s8 %v331
    %v333 = vlaneseq
    %v334 = vshrl.u32 %v333, 7
    %v335 = vsub.s32 %v332, %v334
    %v336 = vrot.slane %v314, %v335
    %v338 = vunpack.c.l.s4 1966171168
    %v339 = vunpack.c.0.s8 %v338
    %v340 = vlaneseq
    %v341 = vshrl.u32 %v340, 7
    %v342 = vsub.s32 %v339, %v341
    %v343 = vrot.slane %v315, %v342
    %v344 = vcombine.high %v322, %v322
    %v345 = vcombine.high %v329, %v329
    %v346 = vcombine.high %v336, %v336
    %v347 = vcombine.high %v343, %v343
    %vm348 = vnez %v322
    %vm349 = vnez %v336
    %vm350 = vnez %v344
    %vm351 = vnez %v346
    %vm352 = vnez %v329
    %vm353 = vnez %v343
    %vm354 = vnez %v345
    %vm355 = vnez %v347
    %v356 = vsel %vm348, 16843009, 0
    %v357 = vsel %vm349, 16843009, 0
    %v358 = vsel %vm350, 16843009, 0
    %v359 = vsel %vm351, 16843009, 0
    %v360 = vsel %vm352, 16843009, 0
    %v361 = vsel %vm353, 16843009, 0
    %v362 = vsel %vm354, 16843009, 0
    %v363 = vsel %vm355, 16843009, 0
    %v364 = vcombine.low %v356, %v357
    %v365 = vcombine.low %v358, %v359
    %v366 = vcombine.low %v360, %v361
    %v367 = vcombine.low %v362, %v363
    %v369 = vunpack.c.l.s4 1966171168
    %v370 = vunpack.c.0.s8 %v369
    %v371 = vlaneseq
    %v372 = vshrl.u32 %v371, 7
    %v373 = vsub.s32 %v370, %v372
    %v374 = vrot.slane %v364, %v373
    %v376 = vunpack.c.l.s4 1966171168
    %v377 = vunpack.c.0.s8 %v376
    %v378 = vlaneseq
    %v379 = vshrl.u32 %v378, 7
    %v380 = vsub.s32 %v377, %v379
    %v381 = vrot.slane %v365, %v380
    %v383 = vunpack.c.l.s4 1966171168
    %v384 = vunpack.c.0.s8 %v383
    %v385 = vlaneseq
    %v386 = vshrl.u32 %v385, 7
    %v387 = vsub.s32 %v384, %v386
    %v388 = vrot.slane %v366, %v387
    %v390 = vunpack.c.l.s4 1966171168
    %v391 = vunpack.c.0.s8 %v390
    %v392 = vlaneseq
    %v393 = vshrl.u32 %v392, 7
    %v394 = vsub.s32 %v391, %v393
    %v395 = vrot.slane %v367, %v394
    %v396 = vcombine.low %v374, %v381
    %v397 = vcombine.low %v388, %v395
    %v399 = vunpack.c.l.s4 1966171168
    %v400 = vunpack.c.0.s8 %v399
    %v401 = vlaneseq
    %v402 = vshrl.u32 %v401, 7
    %v403 = vsub.s32 %v400, %v402
    %v404 = vrot.slane %v396, %v403
    %v406 = vunpack.c.l.s4 1966171168
    %v407 = vunpack.c.0.s8 %v406
    %v408 = vlaneseq
    %v409 = vshrl.u32 %v408, 7
    %v410 = vsub.s32 %v407, %v409
    %v411 = vrot.slane %v397, %v410
    %v412 = vcombine.low %v404, %v411
    %v413 = vld [vmem:[#allocation14] sm:$0xff]
    %v414 = vsel %vm248, %v412, %v413
    %415 = vst [vmem:[#allocation14] sm:$0xff] %v414
    %vm416 = vcmp.eq.f32.partialorder %v35, 3.0
    %vm417 = vcmp.eq.f32.partialorder %v36, 3.0
    %v418 = vsel %vm416, 1, 0
    %v419 = vsel %vm417, 1, 0
    %v420 = vcombine.high %v418, %v418
    %v422 = vunpack.c.l.s4 1983009808
    %v423 = vunpack.c.0.s8 %v422
    %v424 = vlaneseq
    %v425 = vshrl.u32 %v424, 7
    %v426 = vsub.s32 %v423, %v425
    %v427 = vrot.slane %v418, %v426
    %v429 = vunpack.c.l.s4 1983009808
    %v430 = vunpack.c.0.s8 %v429
    %v431 = vlaneseq
    %v432 = vshrl.u32 %v431, 7
    %v433 = vsub.s32 %v430, %v432
    %v434 = vrot.slane %v420, %v433
    %v435 = vcombine.high %v419, %v419
    %v437 = vunpack.c.l.s4 1983009808
    %v438 = vunpack.c.0.s8 %v437
    %v439 = vlaneseq
    %v440 = vshrl.u32 %v439, 7
    %v441 = vsub.s32 %v438, %v440
    %v442 = vrot.slane %v419, %v441
    %v444 = vunpack.c.l.s4 1983009808
    %v445 = vunpack.c.0.s8 %v444
    %v446 = vlaneseq
    %v447 = vshrl.u32 %v446, 7
    %v448 = vsub.s32 %v445, %v447
    %v449 = vrot.slane %v435, %v448
    %vm450 = vcmp.ne.s32.totalorder %v427, 0
    %vm451 = vcmp.ne.s32.totalorder %v434, 0
    %vm452 = vcmp.ne.s32.totalorder %v442, 0
    %vm453 = vcmp.ne.s32.totalorder %v449, 0
    %v454 = vsel %vm450, 1, 0
    %v455 = vsel %vm451, 1, 0
    %v456 = vsel %vm452, 1, 0
    %v457 = vsel %vm453, 1, 0
    %v458 = vpack.c.b16 %v455, %v454
    %v459 = vpack.c.b16 %v457, %v456
    %v460 = vpack.c.b8 %v459, %v458
    %vm461 = vnez %v460
    %v462 = vsel %vm461, 16843009, 0
    %v463 = vcombine.high %v462, %v462
    %v465 = vunpack.c.l.s4 1966171168
    %v466 = vunpack.c.0.s8 %v465
    %v467 = vlaneseq
    %v468 = vshrl.u32 %v467, 7
    %v469 = vsub.s32 %v466, %v468
    %v470 = vrot.slane %v462, %v469
    %v472 = vunpack.c.l.s4 1966171168
    %v473 = vunpack.c.0.s8 %v472
    %v474 = vlaneseq
    %v475 = vshrl.u32 %v474, 7
    %v476 = vsub.s32 %v473, %v475
    %v477 = vrot.slane %v463, %v476
    %v478 = vcombine.high %v470, %v470
    %v479 = vcombine.high %v477, %v477
    %v481 = vunpack.c.l.s4 1966171168
    %v482 = vunpack.c.0.s8 %v481
    %v483 = vlaneseq
    %v484 = vshrl.u32 %v483, 7
    %v485 = vsub.s32 %v482, %v484
    %v486 = vrot.slane %v470, %v485
    %v488 = vunpack.c.l.s4 1966171168
    %v489 = vunpack.c.0.s8 %v488
    %v490 = vlaneseq
    %v491 = vshrl.u32 %v490, 7
    %v492 = vsub.s32 %v489, %v491
    %v493 = vrot.slane %v477, %v492
    %v495 = vunpack.c.l.s4 1966171168
    %v496 = vunpack.c.0.s8 %v495
    %v497 = vlaneseq
    %v498 = vshrl.u32 %v497, 7
    %v499 = vsub.s32 %v496, %v498
    %v500 = vrot.slane %v478, %v499
    %v502 = vunpack.c.l.s4 1966171168
    %v503 = vunpack.c.0.s8 %v502
    %v504 = vlaneseq
    %v505 = vshrl.u32 %v504, 7
    %v506 = vsub.s32 %v503, %v505
    %v507 = vrot.slane %v479, %v506
    %v508 = vcombine.high %v486, %v486
    %v509 = vcombine.high %v493, %v493
    %v510 = vcombine.high %v500, %v500
    %v511 = vcombine.high %v507, %v507
    %vm512 = vnez %v486
    %vm513 = vnez %v500
    %vm514 = vnez %v508
    %vm515 = vnez %v510
    %vm516 = vnez %v493
    %vm517 = vnez %v507
    %vm518 = vnez %v509
    %vm519 = vnez %v511
    %v520 = vsel %vm512, 16843009, 0
    %v521 = vsel %vm513, 16843009, 0
    %v522 = vsel %vm514, 16843009, 0
    %v523 = vsel %vm515, 16843009, 0
    %v524 = vsel %vm516, 16843009, 0
    %v525 = vsel %vm517, 16843009, 0
    %v526 = vsel %vm518, 16843009, 0
    %v527 = vsel %vm519, 16843009, 0
    %v528 = vcombine.low %v520, %v521
    %v529 = vcombine.low %v522, %v523
    %v530 = vcombine.low %v524, %v525
    %v531 = vcombine.low %v526, %v527
    %v533 = vunpack.c.l.s4 1966171168
    %v534 = vunpack.c.0.s8 %v533
    %v535 = vlaneseq
    %v536 = vshrl.u32 %v535, 7
    %v537 = vsub.s32 %v534, %v536
    %v538 = vrot.slane %v528, %v537
    %v540 = vunpack.c.l.s4 1966171168
    %v541 = vunpack.c.0.s8 %v540
    %v542 = vlaneseq
    %v543 = vshrl.u32 %v542, 7
    %v544 = vsub.s32 %v541, %v543
    %v545 = vrot.slane %v529, %v544
    %v547 = vunpack.c.l.s4 1966171168
    %v548 = vunpack.c.0.s8 %v547
    %v549 = vlaneseq
    %v550 = vshrl.u32 %v549, 7
    %v551 = vsub.s32 %v548, %v550
    %v552 = vrot.slane %v530, %v551
    %v554 = vunpack.c.l.s4 1966171168
    %v555 = vunpack.c.0.s8 %v554
    %v556 = vlaneseq
    %v557 = vshrl.u32 %v556, 7
    %v558 = vsub.s32 %v555, %v557
    %v559 = vrot.slane %v531, %v558
    %v560 = vcombine.low %v538, %v545
    %v561 = vcombine.low %v552, %v559
    %v563 = vunpack.c.l.s4 1966171168
    %v564 = vunpack.c.0.s8 %v563
    %v565 = vlaneseq
    %v566 = vshrl.u32 %v565, 7
    %v567 = vsub.s32 %v564, %v566
    %v568 = vrot.slane %v560, %v567
    %v570 = vunpack.c.l.s4 1966171168
    %v571 = vunpack.c.0.s8 %v570
    %v572 = vlaneseq
    %v573 = vshrl.u32 %v572, 7
    %v574 = vsub.s32 %v571, %v573
    %v575 = vrot.slane %v561, %v574
    %v576 = vcombine.low %v568, %v575
    %v577 = vld [vmem:[#allocation15] sm:$0xff]
    %v578 = vsel %vm248, %v576, %v577
    %579 = vst [vmem:[#allocation15] sm:$0xff] %v578
    // Predicated region
    $region10: #{tpu_custom_call.1} parent=1 // pred_check
      _
    $region11: #{tpu_custom_call.1} parent=1 // pred_check_branch
      %581 = sbr.rel (0) target = $region13
    $region12: #{tpu_custom_call.1} parent=1 // pred_region
      %s583 = ssub.s32 256, 256
      %584 = vsyncadd [#allocation4], %s583
      %s586 = sshll.u32 [#allocation5], 4
      %s587 = int_to_ptr.vmem [resolvable:$true] %s586
      %589 = dma.vmem_to_hbm [thread:$0]  %s587, 256, %s1, [#allocation4]
    $region13: #{tpu_custom_call.1} parent=1 // pred_fallthru
      _
    // Predicated region
    $region14: #{tpu_custom_call.1} parent=1 // pred_check
      _
    $region15: #{tpu_custom_call.1} parent=1 // pred_check_branch
      %591 = sbr.rel (0) target = $region17
    $region16: #{tpu_custom_call.1} parent=1 // pred_region
      %s593 = ssub.s32 256, 256
      %594 = vsyncadd [#allocation7], %s593
      %s596 = sshll.u32 [#allocation6], 4
      %s597 = int_to_ptr.vmem [resolvable:$true] %s596
      %599 = dma.vmem_to_hbm [thread:$0]  %s597, 256, %s2, [#allocation7]
    $region17: #{tpu_custom_call.1} parent=1 // pred_fallthru
      _
    // Predicated region
    $region18: #{tpu_custom_call.1} parent=1 // pred_check
      _
    $region19: #{tpu_custom_call.1} parent=1 // pred_check_branch
      %601 = sbr.rel (0) target = $region21
    $region20: #{tpu_custom_call.1} parent=1 // pred_region
      %s603 = ssub.s32 256, 256
      %604 = vsyncadd [#allocation7], %s603
      %s606 = sshll.u32 [#allocation8], 4
      %s607 = int_to_ptr.vmem [resolvable:$true] %s606
      %609 = dma.vmem_to_hbm [thread:$0]  %s607, 256, %s3, [#allocation7]
    $region21: #{tpu_custom_call.1} parent=1 // pred_fallthru
      _
    // Predicated region
    $region22: #{tpu_custom_call.1} parent=1 // pred_check
      _
    $region23: #{tpu_custom_call.1} parent=1 // pred_check_branch
      %611 = sbr.rel (0) target = $region25
    $region24: #{tpu_custom_call.1} parent=1 // pred_region
      %s613 = ssub.s32 256, 256
      %614 = vsyncadd [#allocation10], %s613
      %s616 = sshll.u32 [#allocation9], 4
      %s617 = int_to_ptr.vmem [resolvable:$true] %s616
      %619 = dma.vmem_to_hbm [thread:$0]  %s617, 256, %s4, [#allocation10]
    $region25: #{tpu_custom_call.1} parent=1 // pred_fallthru
      _
    // Predicated region
    $region26: #{tpu_custom_call.1} parent=1 // pred_check
      _
    $region27: #{tpu_custom_call.1} parent=1 // pred_check_branch
      %621 = sbr.rel (0) target = $region29
    $region28: #{tpu_custom_call.1} parent=1 // pred_region
      %s623 = ssub.s32 256, 256
      %624 = vsyncadd [#allocation10], %s623
      %s626 = sshll.u32 [#allocation11], 4
      %s627 = int_to_ptr.vmem [resolvable:$true] %s626
      %629 = dma.vmem_to_hbm [thread:$0]  %s627, 256, %s5, [#allocation10]
    $region29: #{tpu_custom_call.1} parent=1 // pred_fallthru
      _
    // Predicated region
    $region30: #{tpu_custom_call.1} parent=1 // pred_check
      _
    $region31: #{tpu_custom_call.1} parent=1 // pred_check_branch
      %631 = sbr.rel (0) target = $region33
    $region32: #{tpu_custom_call.1} parent=1 // pred_region
      %s633 = ssub.s32 128, 128
      %634 = vsyncadd [#allocation13], %s633
      %s636 = sshll.u32 [#allocation12], 4
      %s637 = int_to_ptr.vmem [resolvable:$true] %s636
      %639 = dma.vmem_to_hbm [thread:$0]  %s637, 128, %s6, [#allocation13]
    $region33: #{tpu_custom_call.1} parent=1 // pred_fallthru
      _
    // Predicated region
    $region34: #{tpu_custom_call.1} parent=1 // pred_check
      _
    $region35: #{tpu_custom_call.1} parent=1 // pred_check_branch
      %641 = sbr.rel (0) target = $region37
    $region36: #{tpu_custom_call.1} parent=1 // pred_region
      %s643 = ssub.s32 128, 128
      %644 = vsyncadd [#allocation13], %s643
      %s646 = sshll.u32 [#allocation14], 4
      %s647 = int_to_ptr.vmem [resolvable:$true] %s646
      %649 = dma.vmem_to_hbm [thread:$0]  %s647, 128, %s7, [#allocation13]
    $region37: #{tpu_custom_call.1} parent=1 // pred_fallthru
      _
    // Predicated region
    $region38: #{tpu_custom_call.1} parent=1 // pred_check
      _
    $region39: #{tpu_custom_call.1} parent=1 // pred_check_branch
      %651 = sbr.rel (0) target = $region41
    $region40: #{tpu_custom_call.1} parent=1 // pred_region
      %s653 = ssub.s32 128, 128
      %654 = vsyncadd [#allocation16], %s653
      %s656 = sshll.u32 [#allocation15], 4
      %s657 = int_to_ptr.vmem [resolvable:$true] %s656
      %659 = dma.vmem_to_hbm [thread:$0]  %s657, 128, %s8, [#allocation16]
    $region41: #{tpu_custom_call.1} parent=1 // pred_fallthru
      _
    // Predicated region
    $region42: #{tpu_custom_call.1} parent=1 // pred_check
      _
    $region43: #{tpu_custom_call.1} parent=1 // pred_check_branch
      %661 = sbr.rel (0) target = $region45
    $region44: #{tpu_custom_call.1} parent=1 // pred_region
      %662 = dma.done [#allocation4], 256
    $region45: #{tpu_custom_call.1} parent=1 // pred_fallthru
      _
    // Predicated region
    $region46: #{tpu_custom_call.1} parent=1 // pred_check
      _
    $region47: #{tpu_custom_call.1} parent=1 // pred_check_branch
      %664 = sbr.rel (0) target = $region49
    $region48: #{tpu_custom_call.1} parent=1 // pred_region
      %665 = dma.done [#allocation7], 256
    $region49: #{tpu_custom_call.1} parent=1 // pred_fallthru
      _
    // Predicated region
    $region50: #{tpu_custom_call.1} parent=1 // pred_check
      _
    $region51: #{tpu_custom_call.1} parent=1 // pred_check_branch
      %667 = sbr.rel (0) target = $region53
    $region52: #{tpu_custom_call.1} parent=1 // pred_region
      %668 = dma.done [#allocation7], 256
    $region53: #{tpu_custom_call.1} parent=1 // pred_fallthru
      _
    // Predicated region
    $region54: #{tpu_custom_call.1} parent=1 // pred_check
      _
    $region55: #{tpu_custom_call.1} parent=1 // pred_check_branch
      %670 = sbr.rel (0) target = $region57
    $region56: #{tpu_custom_call.1} parent=1 // pred_region
      %671 = dma.done [#allocation10], 256
    $region57: #{tpu_custom_call.1} parent=1 // pred_fallthru
      _
    // Predicated region
    $region58: #{tpu_custom_call.1} parent=1 // pred_check
      _
    $region59: #{tpu_custom_call.1} parent=1 // pred_check_branch
      %673 = sbr.rel (0) target = $region61
    $region60: #{tpu_custom_call.1} parent=1 // pred_region
      %674 = dma.done [#allocation10], 256
    $region61: #{tpu_custom_call.1} parent=1 // pred_fallthru
      _
    // Predicated region
    $region62: #{tpu_custom_call.1} parent=1 // pred_check
      _
    $region63: #{tpu_custom_call.1} parent=1 // pred_check_branch
      %676 = sbr.rel (0) target = $region65
    $region64: #{tpu_custom_call.1} parent=1 // pred_region
      %677 = dma.done [#allocation13], 128
    $region65: #{tpu_custom_call.1} parent=1 // pred_fallthru
      _
    // Predicated region
    $region66: #{tpu_custom_call.1} parent=1 // pred_check
      _
    $region67: #{tpu_custom_call.1} parent=1 // pred_check_branch
      %679 = sbr.rel (0) target = $region69
    $region68: #{tpu_custom_call.1} parent=1 // pred_region
      %680 = dma.done [#allocation13], 128
    $region69: #{tpu_custom_call.1} parent=1 // pred_fallthru
      _
    // Predicated region
    $region70: #{tpu_custom_call.1} parent=1 // pred_check
      _
    $region71: #{tpu_custom_call.1} parent=1 // pred_check_branch
      %682 = sbr.rel (0) target = $region73
    $region72: #{tpu_custom_call.1} parent=1 // pred_region
      %683 = dma.done [#allocation16], 128
    $region73: #{tpu_custom_call.1} parent=1 // pred_fallthru
      _
    %684 = vsyncpa [#allocation3], 1
    %685 = vsyncpa [#allocation4], 1
    %686 = vsyncpa [#allocation7], 1
    %687 = vsyncpa [#allocation10], 1
    %688 = vsyncpa [#allocation13], 1
    %689 = vsyncpa [#allocation16], 1

</llo_original>
